<compile_context>
chip_gen: v6e
topology: v6e:2x2x1
jax: 0.10.0
libtpu: 0.0.40
codegen_flags: <defaults>
</compile_context>

<pallas_src>
import functools

import jax
import jax.numpy as jnp
from jax import lax
from jax.experimental import pallas as pl
from jax.experimental.pallas import tpu as pltpu

M = 8          # number of heads (matches the torch module's global M)
BN_EPS = 1e-5  # nn.BatchNorm1d default eps


# -----------------------------------------------------------------------------
# Pallas kernel: the whole forward pass for the (small) full batch.
# -----------------------------------------------------------------------------
def _mha_kernel(x_ref, wqkv_ref, bqkv_ref, w1_ref, g_ref, gt_ref, vecs_ref,
                bf1_ref, wf1_hbm, wf2_hbm, out_ref,
                wf1_vmem, wf2_vmem, dma_sem, *, B, N, E):
    BN = B * N
    R = B * N * N          # rows of the (b, i, j) expansion
    f32 = jnp.float32
    bf16 = jnp.bfloat16

    # --- kick off the FFN weight DMA immediately; it is hidden behind the
    #     QKV / attention / out-proj / BN1 section below. ----------------------
    cp_wf1 = pltpu.make_async_copy(wf1_hbm, wf1_vmem, dma_sem.at[0])
    cp_wf2 = pltpu.make_async_copy(wf2_hbm, wf2_vmem, dma_sem.at[1])
    cp_wf1.start()
    cp_wf2.start()

    x = x_ref[...]                                                    # (BN, E) f32

    # --- fused QKV projection (1/sqrt(dk) pre-folded into the Q columns);
    #     bf16 inputs at the MXU, f32 accumulation. ----------------------------
    qkv = jnp.dot(x.astype(bf16), wqkv_ref[...],
                  preferred_element_type=f32) + bqkv_ref[...]         # (BN, 3E)
    q = qkv[:, :E]                         # lane-aligned 128-wide slices
    k = qkv[:, E:2 * E]
    v = qkv[:, 2 * E:]

    # --- batched multi-head attention (no per-(batch, head) loop, no selection
    #     matmuls): row r of the expansion enumerates (b, i, j) = b*N*N + i*N + j.
    qk = (q.reshape(B, N, 1, E) * k.reshape(B, 1, N, E)).reshape(R, E)
    # per-head score: s[(b,i,j), h] = sum_{e in head h} q[b,i,e] * k[b,j,e]
    s = jnp.dot(qk, g_ref[...], preferred_element_type=f32)           # (R, M)

    # softmax over the key index j (torch softmax dim=2)
    s3 = s.reshape(BN, N, M)
    s3 = s3 - jnp.max(s3, axis=1, keepdims=True)
    p3 = jnp.exp(s3)
    p3 = p3 * pl.reciprocal(jnp.sum(p3, axis=1, keepdims=True), approx=True)
    # TODO(synk): the (R, M) score layout only fills 8 of 128 lanes; a packed
    # (BN, N*M) lane layout would cut VPU/EUP pushes ~16x but needs a segmented
    # lane reduce -- not worth the complexity at this size.

    # expand probs back to E lanes and do the weighted sum over j; v is consumed
    # directly as a broadcast tile (no separate (R, E) v expansion kept live).
    p_e = jnp.dot(p3.reshape(R, M), gt_ref[...], preferred_element_type=f32)
    pv = p_e.reshape(B, N, N, E) * v.reshape(B, 1, N, E)
    a = jnp.sum(pv.reshape(BN, N, E), axis=1)                         # (BN, E)

    # --- packed small per-feature vectors -------------------------------------
    vecs = vecs_ref[...]                                              # (8, E)
    b1, bf2b = vecs[0:1, :], vecs[1:2, :]
    g1, be1 = vecs[2:3, :], vecs[3:4, :]
    g2, be2 = vecs[4:5, :], vecs[5:6, :]

    # --- output projection + residual ------------------------------------------
    y = jnp.dot(a.astype(bf16), w1_ref[...], preferred_element_type=f32) + b1 + x

    # --- BatchNorm1d #1 (training-mode batch stats over the B*N samples) -------
    mu = jnp.mean(y, axis=0, keepdims=True)
    var = jnp.mean((y - mu) ** 2, axis=0, keepdims=True)
    y = (y - mu) * lax.rsqrt(var + BN_EPS) * g1 + be1

    # --- feed-forward: Linear(E->4E) -> ReLU -> Linear(4E->E) + residual -------
    cp_wf1.wait()        # first point the manually-DMA'd weights are needed
    hid = jnp.dot(y.astype(bf16), wf1_vmem[...],
                  preferred_element_type=f32) + bf1_ref[...]
    hid = jnp.maximum(hid, 0.0)
    cp_wf2.wait()
    y = y + jnp.dot(hid.astype(bf16), wf2_vmem[...],
                    preferred_element_type=f32) + bf2b

    # --- BatchNorm1d #2 ---------------------------------------------------------
    mu2 = jnp.mean(y, axis=0, keepdims=True)
    var2 = jnp.mean((y - mu2) ** 2, axis=0, keepdims=True)
    y = (y - mu2) * lax.rsqrt(var2 + BN_EPS) * g2 + be2

    out_ref[...] = y
    # TODO(synk): BatchNorm running_mean/running_var buffer updates (a training-side
    # effect not visible in this forward's output) are not reproduced.


# -----------------------------------------------------------------------------
# Wrapper: parameter packing + pallas_call
# -----------------------------------------------------------------------------
def mha_pallas(node, params):
    B, N, E = node.shape
    assert E == M * 16, "torch module hard-codes head dim 16 -> embedding must be 128"
    assert (B * N) % 8 == 0, "B*N must be a multiple of 8 (sublane tiling)"
    assert N % 8 == 0, "city_size must be a multiple of 8 (sublane tiling)"
    # TODO(synk): for large B*N add a row grid (dimension_semantics=('parallel',))
    # with a cross-block BatchNorm stats reduction; the everything-resident design
    # is fine at this size but would hit v7x's 64 MiB VMEM / leave a TC idle.

    f32, bf16 = jnp.float32, jnp.bfloat16
    BN, R = B * N, B * N * N
    DH = E // M

    x2d = node.reshape(BN, E).astype(f32)
    scale = 1.0 / ((E / M) ** 0.5)   # 1/sqrt(dk), folded into the Q projection

    # Weights stored / DMA'd / MXU-fed in bf16; biases & BN params stay f32.
    wqkv = jnp.concatenate(
        [params["wq"] * scale, params["wk"], params["wv"]], axis=1).astype(bf16)
    bqkv = jnp.concatenate(
        [params["bq"] * scale, params["bk"], params["bv"]], axis=1)   # (1, 3E) f32
    w1 = params["w1"].astype(bf16)
    wf1 = params["wf1"].astype(bf16)     # (E, 4E)  -> manual, overlapped DMA
    wf2 = params["wf2"].astype(bf16)     # (4E, E)  -> manual, overlapped DMA

    # Head-indicator matrices (exact 0/1), precomputed on host.
    head_of_lane = jnp.arange(E, dtype=jnp.int32) // DH
    heads = jnp.arange(M, dtype=jnp.int32)
    g = (head_of_lane[:, None] == heads[None, :]).astype(f32)         # (E, M)
    gt = (heads[:, None] == head_of_lane[None, :]).astype(f32)        # (M, E)

    vecs = jnp.concatenate(
        [params["b1"], params["bf2"], params["g1"], params["be1"],
         params["g2"], params["be2"], jnp.zeros((2, E), f32)], axis=0)  # (8, E)

    inputs = [x2d, wqkv, bqkv, w1, g, gt, vecs, params["bf1"], wf1, wf2]

    vmem = pl.BlockSpec(memory_space=pltpu.MemorySpace.VMEM)
    hbm = pl.BlockSpec(memory_space=pl.ANY)   # wf1 / wf2: manual async copy

    flops = (2 * BN * E * 3 * E          # fused QKV projection
             + 2 * R * E * M             # per-head score reduction
             + 2 * R * M * E             # prob -> lane expansion
             + 2 * BN * E * E            # output projection
             + 2 * BN * E * 4 * E        # FFN up
             + 2 * BN * 4 * E * E)       # FFN down
    bytes_accessed = int(sum(a.size * a.dtype.itemsize for a in inputs)
                         + BN * E * 4)
    cost = pl.CostEstimate(flops=int(flops),
                           transcendentals=int(R * M + BN * M + 2 * E),
                           bytes_accessed=bytes_accessed)

    out = pl.pallas_call(
        functools.partial(_mha_kernel, B=B, N=N, E=E),
        out_shape=jax.ShapeDtypeStruct((BN, E), f32),
        in_specs=[vmem] * 8 + [hbm, hbm],
        out_specs=vmem,
        scratch_shapes=[pltpu.VMEM((E, 4 * E), bf16),
                        pltpu.VMEM((4 * E, E), bf16),
                        pltpu.SemaphoreType.DMA((2,))],
        cost_estimate=cost,
    )(*inputs)
    return out.reshape(B, N, E)


# -----------------------------------------------------------------------------
# Pure-JAX f32 reference (mirrors the torch forward exactly) for a sanity check.
# -----------------------------------------------------------------------------
def mha_reference(node, params):
    B, N, E = node.shape
    DH = E // M
    dk = E / M

    def bn(x, g, b):
        mu = jnp.mean(x, axis=(0, 1), keepdims=True)
        var = jnp.mean((x - mu) ** 2, axis=(0, 1), keepdims=True)
        return (x - mu) / jnp.sqrt(var + BN_EPS) * g.reshape(1, 1, E) + b.reshape(1, 1, E)

    q = node @ params["wq"] + params["bq"]
    k = node @ params["wk"] + params["bk"]
    v = node @ params["wv"] + params["bv"]

    x = q[:, :, None, :] * k[:, None, :, :]                  # (B,N,N,E)
    x = x.reshape(B, N, N, M, DH).sum(axis=4) / (dk ** 0.5)  # (B,N,N,M)
    x = jax.nn.softmax(x, axis=2)
    x = jnp.repeat(x[..., None], DH, axis=-1).reshape(B, N, N, E)
    x = (x * v[:, None, :, :]).sum(axis=2)                   # (B,N,E)

    x = x @ params["w1"] + params["b1"]
    x = x + node
    x = bn(x, params["g1"], params["be1"])

    x1 = jax.nn.relu(x @ params["wf1"] + params["bf1"])
    x1 = x1 @ params["wf2"] + params["bf2"]
    x = x + x1
    x = bn(x, params["g2"], params["be2"])
    return x


# -----------------------------------------------------------------------------
# Deterministic parameter init (mimics nn.Linear default U(-1/sqrt(fan_in), ...))
# -----------------------------------------------------------------------------
def init_params(key, E):
    def linear(k, fan_in, fan_out):
        kw, kb = jax.random.split(k)
        bound = 1.0 / (fan_in ** 0.5)
        w = jax.random.uniform(kw, (fan_in, fan_out), jnp.float32, -bound, bound)
        b = jax.random.uniform(kb, (1, fan_out), jnp.float32, -bound, bound)
        return w, b

    keys = jax.random.split(key, 6)
    wq, bq = linear(keys[0], E, E)
    wk, bk = linear(keys[1], E, E)
    wv, bv = linear(keys[2], E, E)
    w1, b1 = linear(keys[3], E, E)
    wf1, bf1 = linear(keys[4], E, 4 * E)
    wf2, bf2 = linear(keys[5], 4 * E, E)
    return {
        "wq": wq, "bq": bq, "wk": wk, "bk": bk, "wv": wv, "bv": bv,
        "w1": w1, "b1": b1, "wf1": wf1, "bf1": bf1, "wf2": wf2, "bf2": bf2,
        "g1": jnp.ones((1, E), jnp.float32), "be1": jnp.zeros((1, E), jnp.float32),
        "g2": jnp.ones((1, E), jnp.float32), "be2": jnp.zeros((1, E), jnp.float32),
    }


if __name__ == "__main__":
    temp_len = 2      # batch
    city_size = 8     # sequence / number of cities
    embedding = 128   # must be M * 16 = 128 (the torch module hard-codes head dim 16)

    key = jax.random.PRNGKey(0)
    k_node, k_params = jax.random.split(key)
    node = jax.random.normal(k_node, (temp_len, city_size, embedding), jnp.float32)
    params = init_params(k_params, embedding)

    out = mha_pallas(node, params)
    out = jax.block_until_ready(out)

    ref = mha_reference(node, params)
    assert out.shape == (temp_len, city_size, embedding)
    err = float(jnp.max(jnp.abs(out - ref)))
    # bf16 weights / bf16-at-MXU (per the perf review) => looser-than-f32 tolerance.
    assert jnp.allclose(out, ref, rtol=3e-2, atol=3e-2), err

    print("KERNEL_OK")
</pallas_src>

<mosaic_0001>
module attributes {stable_mosaic.version = 11 : i64} {
  func.func @_mha_kernel(%arg0: memref<16x128xf32, #tpu.memory_space<vmem>>, %arg1: memref<128x384xbf16, #tpu.memory_space<vmem>>, %arg2: memref<1x384xf32, #tpu.memory_space<vmem>>, %arg3: memref<128x128xbf16, #tpu.memory_space<vmem>>, %arg4: memref<128x8xf32, #tpu.memory_space<vmem>>, %arg5: memref<8x128xf32, #tpu.memory_space<vmem>>, %arg6: memref<8x128xf32, #tpu.memory_space<vmem>>, %arg7: memref<1x512xf32, #tpu.memory_space<vmem>>, %arg8: memref<128x512xbf16, #tpu.memory_space<any>>, %arg9: memref<512x128xbf16, #tpu.memory_space<any>>, %arg10: memref<16x128xf32, #tpu.memory_space<vmem>>, %arg11: memref<128x512xbf16, #tpu.memory_space<vmem>>, %arg12: memref<512x128xbf16, #tpu.memory_space<vmem>>, %arg13: memref<2x!tpu.dma_semaphore, #tpu.memory_space<semaphore_mem>>) attributes {dimension_semantics = [], scalar_prefetch = 0 : i64, scratch_operands = 3 : i64, tpu.core_type = #tpu.core_type<tc>} {
    %c0_i32 = arith.constant 0 : i32
    %0 = tpu.memref_slice %arg13[%c0_i32] : memref<2x!tpu.dma_semaphore, #tpu.memory_space<semaphore_mem>> -> memref<1x!tpu.dma_semaphore, #tpu.memory_space<semaphore_mem>>
    %1 = tpu.memref_squeeze %0 : memref<1x!tpu.dma_semaphore, #tpu.memory_space<semaphore_mem>> -> memref<!tpu.dma_semaphore, #tpu.memory_space<semaphore_mem>>
    tpu.enqueue_dma source(%arg8 : memref<128x512xbf16, #tpu.memory_space<any>>) target(%arg11 : memref<128x512xbf16, #tpu.memory_space<vmem>>) target_semaphore(%1 : memref<!tpu.dma_semaphore, #tpu.memory_space<semaphore_mem>>)
    %c1_i32 = arith.constant 1 : i32
    %2 = tpu.memref_slice %arg13[%c1_i32] : memref<2x!tpu.dma_semaphore, #tpu.memory_space<semaphore_mem>> -> memref<1x!tpu.dma_semaphore, #tpu.memory_space<semaphore_mem>>
    %3 = tpu.memref_squeeze %2 : memref<1x!tpu.dma_semaphore, #tpu.memory_space<semaphore_mem>> -> memref<!tpu.dma_semaphore, #tpu.memory_space<semaphore_mem>>
    tpu.enqueue_dma source(%arg9 : memref<512x128xbf16, #tpu.memory_space<any>>) target(%arg12 : memref<512x128xbf16, #tpu.memory_space<vmem>>) target_semaphore(%3 : memref<!tpu.dma_semaphore, #tpu.memory_space<semaphore_mem>>)
    %c0 = arith.constant 0 : index
    %c0_0 = arith.constant 0 : index
    %4 = vector.load %arg0[%c0, %c0_0] : memref<16x128xf32, #tpu.memory_space<vmem>>, vector<16x128xf32>
    %5 = arith.truncf %4 : vector<16x128xf32> to vector<16x128xbf16>
    %c0_1 = arith.constant 0 : index
    %c0_2 = arith.constant 0 : index
    %6 = vector.load %arg1[%c0_1, %c0_2] : memref<128x384xbf16, #tpu.memory_space<vmem>>, vector<128x384xbf16>
    %cst = arith.constant dense<0.000000e+00> : vector<16x384xf32>
    %7 = tpu.matmul %5, %6, %cst {dimension_numbers = #tpu.dot_dimension_numbers<[1], [0], [0], [1], [0, 0, 1, 1], [], []>} : vector<16x128xbf16>, vector<128x384xbf16>, vector<16x384xf32> -> vector<16x384xf32>
    %c0_3 = arith.constant 0 : index
    %c0_4 = arith.constant 0 : index
    %8 = vector.load %arg2[%c0_3, %c0_4] : memref<1x384xf32, #tpu.memory_space<vmem>>, vector<1x384xf32>
    %9 = vector.broadcast %8 : vector<1x384xf32> to vector<16x384xf32>
    %10 = arith.addf %7, %9 : vector<16x384xf32>
    %11 = vector.extract_strided_slice %10 {offsets = [0, 0], sizes = [16, 128], strides = [1, 1]} : vector<16x384xf32> to vector<16x128xf32>
    %12 = vector.extract_strided_slice %10 {offsets = [0, 128], sizes = [16, 128], strides = [1, 1]} : vector<16x384xf32> to vector<16x128xf32>
    %13 = vector.extract_strided_slice %10 {offsets = [0, 256], sizes = [16, 128], strides = [1, 1]} : vector<16x384xf32> to vector<16x128xf32>
    %14 = vector.shape_cast %11 : vector<16x128xf32> to vector<2x8x1x128xf32>
    %15 = vector.shape_cast %12 : vector<16x128xf32> to vector<2x1x8x128xf32>
    %16 = vector.broadcast %14 : vector<2x8x1x128xf32> to vector<2x8x8x128xf32>
    %17 = vector.broadcast %15 : vector<2x1x8x128xf32> to vector<2x8x8x128xf32>
    %18 = arith.mulf %16, %17 : vector<2x8x8x128xf32>
    %19 = vector.shape_cast %18 : vector<2x8x8x128xf32> to vector<128x128xf32>
    %c0_5 = arith.constant 0 : index
    %c0_6 = arith.constant 0 : index
    %20 = vector.load %arg4[%c0_5, %c0_6] : memref<128x8xf32, #tpu.memory_space<vmem>>, vector<128x8xf32>
    %cst_7 = arith.constant dense<0.000000e+00> : vector<128x8xf32>
    %21 = tpu.matmul %19, %20, %cst_7 {dimension_numbers = #tpu.dot_dimension_numbers<[1], [0], [0], [1], [0, 0, 1, 1], [], []>} : vector<128x128xf32>, vector<128x8xf32>, vector<128x8xf32> -> vector<128x8xf32>
    %22 = vector.shape_cast %21 : vector<128x8xf32> to vector<16x8x8xf32>
    %cst_8 = arith.constant dense<0xFF800000> : vector<16x8xf32>
    %23 = vector.multi_reduction <maximumf>, %22, %cst_8 [1] : vector<16x8x8xf32> to vector<16x8xf32>
    %24 = vector.shape_cast %23 : vector<16x8xf32> to vector<16x1x8xf32>
    %25 = vector.broadcast %24 : vector<16x1x8xf32> to vector<16x8x8xf32>
    %26 = arith.subf %22, %25 : vector<16x8x8xf32>
    %27 = math.exp %26 : vector<16x8x8xf32>
    %cst_9 = arith.constant dense<0.000000e+00> : vector<16x8xf32>
    %28 = vector.multi_reduction <add>, %27, %cst_9 [1] : vector<16x8x8xf32> to vector<16x8xf32>
    %29 = vector.shape_cast %28 : vector<16x8xf32> to vector<16x1x8xf32>
    %30 = tpu.reciprocal %29 {approx = true} : vector<16x1x8xf32> -> vector<16x1x8xf32>
    %31 = vector.broadcast %30 : vector<16x1x8xf32> to vector<16x8x8xf32>
    %32 = arith.mulf %27, %31 : vector<16x8x8xf32>
    %33 = vector.shape_cast %32 : vector<16x8x8xf32> to vector<128x8xf32>
    %c0_10 = arith.constant 0 : index
    %c0_11 = arith.constant 0 : index
    %34 = vector.load %arg5[%c0_10, %c0_11] : memref<8x128xf32, #tpu.memory_space<vmem>>, vector<8x128xf32>
    %cst_12 = arith.constant dense<0.000000e+00> : vector<128x128xf32>
    %35 = tpu.matmul %33, %34, %cst_12 {dimension_numbers = #tpu.dot_dimension_numbers<[1], [0], [0], [1], [0, 0, 1, 1], [], []>} : vector<128x8xf32>, vector<8x128xf32>, vector<128x128xf32> -> vector<128x128xf32>
    %36 = vector.shape_cast %35 : vector<128x128xf32> to vector<2x8x8x128xf32>
    %37 = vector.shape_cast %13 : vector<16x128xf32> to vector<2x1x8x128xf32>
    %38 = vector.broadcast %37 : vector<2x1x8x128xf32> to vector<2x8x8x128xf32>
    %39 = arith.mulf %36, %38 : vector<2x8x8x128xf32>
    %40 = vector.shape_cast %39 : vector<2x8x8x128xf32> to vector<16x8x128xf32>
    %cst_13 = arith.constant dense<0.000000e+00> : vector<16x128xf32>
    %41 = vector.multi_reduction <add>, %40, %cst_13 [1] : vector<16x8x128xf32> to vector<16x128xf32>
    %c0_14 = arith.constant 0 : index
    %c0_15 = arith.constant 0 : index
    %42 = vector.load %arg6[%c0_14, %c0_15] : memref<8x128xf32, #tpu.memory_space<vmem>>, vector<8x128xf32>
    %43 = vector.extract_strided_slice %42 {offsets = [0, 0], sizes = [1, 128], strides = [1, 1]} : vector<8x128xf32> to vector<1x128xf32>
    %44 = vector.extract_strided_slice %42 {offsets = [1, 0], sizes = [1, 128], strides = [1, 1]} : vector<8x128xf32> to vector<1x128xf32>
    %45 = vector.extract_strided_slice %42 {offsets = [2, 0], sizes = [1, 128], strides = [1, 1]} : vector<8x128xf32> to vector<1x128xf32>
    %46 = vector.extract_strided_slice %42 {offsets = [3, 0], sizes = [1, 128], strides = [1, 1]} : vector<8x128xf32> to vector<1x128xf32>
    %47 = vector.extract_strided_slice %42 {offsets = [4, 0], sizes = [1, 128], strides = [1, 1]} : vector<8x128xf32> to vector<1x128xf32>
    %48 = vector.extract_strided_slice %42 {offsets = [5, 0], sizes = [1, 128], strides = [1, 1]} : vector<8x128xf32> to vector<1x128xf32>
    %49 = arith.truncf %41 : vector<16x128xf32> to vector<16x128xbf16>
    %c0_16 = arith.constant 0 : index
    %c0_17 = arith.constant 0 : index
    %50 = vector.load %arg3[%c0_16, %c0_17] : memref<128x128xbf16, #tpu.memory_space<vmem>>, vector<128x128xbf16>
    %cst_18 = arith.constant dense<0.000000e+00> : vector<16x128xf32>
    %51 = tpu.matmul %49, %50, %cst_18 {dimension_numbers = #tpu.dot_dimension_numbers<[1], [0], [0], [1], [0, 0, 1, 1], [], []>} : vector<16x128xbf16>, vector<128x128xbf16>, vector<16x128xf32> -> vector<16x128xf32>
    %52 = vector.broadcast %43 : vector<1x128xf32> to vector<16x128xf32>
    %53 = arith.addf %51, %52 : vector<16x128xf32>
    %54 = arith.addf %53, %4 : vector<16x128xf32>
    %cst_19 = arith.constant dense<0.000000e+00> : vector<128xf32>
    %55 = vector.multi_reduction <add>, %54, %cst_19 [0] : vector<16x128xf32> to vector<128xf32>
    %56 = vector.shape_cast %55 : vector<128xf32> to vector<1x128xf32>
    %cst_20 = arith.constant 1.600000e+01 : f32
    %57 = vector.broadcast %cst_20 : f32 to vector<1x128xf32>
    %58 = arith.divf %56, %57 : vector<1x128xf32>
    %59 = vector.broadcast %58 : vector<1x128xf32> to vector<16x128xf32>
    %60 = arith.subf %54, %59 : vector<16x128xf32>
    %61 = arith.mulf %60, %60 : vector<16x128xf32>
    %cst_21 = arith.constant dense<0.000000e+00> : vector<128xf32>
    %62 = vector.multi_reduction <add>, %61, %cst_21 [0] : vector<16x128xf32> to vector<128xf32>
    %63 = vector.shape_cast %62 : vector<128xf32> to vector<1x128xf32>
    %cst_22 = arith.constant 1.600000e+01 : f32
    %64 = vector.broadcast %cst_22 : f32 to vector<1x128xf32>
    %65 = arith.divf %63, %64 : vector<1x128xf32>
    %66 = vector.broadcast %58 : vector<1x128xf32> to vector<16x128xf32>
    %67 = arith.subf %54, %66 : vector<16x128xf32>
    %cst_23 = arith.constant 9.99999974E-6 : f32
    %68 = vector.broadcast %cst_23 : f32 to vector<1x128xf32>
    %69 = arith.addf %65, %68 : vector<1x128xf32>
    %70 = math.rsqrt %69 : vector<1x128xf32>
    %71 = vector.broadcast %70 : vector<1x128xf32> to vector<16x128xf32>
    %72 = arith.mulf %67, %71 : vector<16x128xf32>
    %73 = vector.broadcast %45 : vector<1x128xf32> to vector<16x128xf32>
    %74 = arith.mulf %72, %73 : vector<16x128xf32>
    %75 = vector.broadcast %46 : vector<1x128xf32> to vector<16x128xf32>
    %76 = arith.addf %74, %75 : vector<16x128xf32>
    %c0_i32_24 = arith.constant 0 : i32
    %77 = tpu.memref_slice %arg13[%c0_i32_24] : memref<2x!tpu.dma_semaphore, #tpu.memory_space<semaphore_mem>> -> memref<1x!tpu.dma_semaphore, #tpu.memory_space<semaphore_mem>>
    %78 = tpu.memref_squeeze %77 : memref<1x!tpu.dma_semaphore, #tpu.memory_space<semaphore_mem>> -> memref<!tpu.dma_semaphore, #tpu.memory_space<semaphore_mem>>
    tpu.wait_dma2 semaphore(%78 : memref<!tpu.dma_semaphore, #tpu.memory_space<semaphore_mem>>) src(%arg8 : memref<128x512xbf16, #tpu.memory_space<any>>) dst(%arg11 : memref<128x512xbf16, #tpu.memory_space<vmem>>)
    %79 = arith.truncf %76 : vector<16x128xf32> to vector<16x128xbf16>
    %c0_25 = arith.constant 0 : index
    %c0_26 = arith.constant 0 : index
    %80 = vector.load %arg11[%c0_25, %c0_26] : memref<128x512xbf16, #tpu.memory_space<vmem>>, vector<128x512xbf16>
    %cst_27 = arith.constant dense<0.000000e+00> : vector<16x512xf32>
    %81 = tpu.matmul %79, %80, %cst_27 {dimension_numbers = #tpu.dot_dimension_numbers<[1], [0], [0], [1], [0, 0, 1, 1], [], []>} : vector<16x128xbf16>, vector<128x512xbf16>, vector<16x512xf32> -> vector<16x512xf32>
    %c0_28 = arith.constant 0 : index
    %c0_29 = arith.constant 0 : index
    %82 = vector.load %arg7[%c0_28, %c0_29] : memref<1x512xf32, #tpu.memory_space<vmem>>, vector<1x512xf32>
    %83 = vector.broadcast %82 : vector<1x512xf32> to vector<16x512xf32>
    %84 = arith.addf %81, %83 : vector<16x512xf32>
    %cst_30 = arith.constant 0.000000e+00 : f32
    %85 = vector.broadcast %cst_30 : f32 to vector<16x512xf32>
    %86 = arith.maximumf %84, %85 : vector<16x512xf32>
    %c1_i32_31 = arith.constant 1 : i32
    %87 = tpu.memref_slice %arg13[%c1_i32_31] : memref<2x!tpu.dma_semaphore, #tpu.memory_space<semaphore_mem>> -> memref<1x!tpu.dma_semaphore, #tpu.memory_space<semaphore_mem>>
    %88 = tpu.memref_squeeze %87 : memref<1x!tpu.dma_semaphore, #tpu.memory_space<semaphore_mem>> -> memref<!tpu.dma_semaphore, #tpu.memory_space<semaphore_mem>>
    tpu.wait_dma2 semaphore(%88 : memref<!tpu.dma_semaphore, #tpu.memory_space<semaphore_mem>>) src(%arg9 : memref<512x128xbf16, #tpu.memory_space<any>>) dst(%arg12 : memref<512x128xbf16, #tpu.memory_space<vmem>>)
    %89 = arith.truncf %86 : vector<16x512xf32> to vector<16x512xbf16>
    %c0_32 = arith.constant 0 : index
    %c0_33 = arith.constant 0 : index
    %90 = vector.load %arg12[%c0_32, %c0_33] : memref<512x128xbf16, #tpu.memory_space<vmem>>, vector<512x128xbf16>
    %cst_34 = arith.constant dense<0.000000e+00> : vector<16x128xf32>
    %91 = tpu.matmul %89, %90, %cst_34 {dimension_numbers = #tpu.dot_dimension_numbers<[1], [0], [0], [1], [0, 0, 1, 1], [], []>} : vector<16x512xbf16>, vector<512x128xbf16>, vector<16x128xf32> -> vector<16x128xf32>
    %92 = arith.addf %76, %91 : vector<16x128xf32>
    %93 = vector.broadcast %44 : vector<1x128xf32> to vector<16x128xf32>
    %94 = arith.addf %92, %93 : vector<16x128xf32>
    %cst_35 = arith.constant dense<0.000000e+00> : vector<128xf32>
    %95 = vector.multi_reduction <add>, %94, %cst_35 [0] : vector<16x128xf32> to vector<128xf32>
    %96 = vector.shape_cast %95 : vector<128xf32> to vector<1x128xf32>
    %cst_36 = arith.constant 1.600000e+01 : f32
    %97 = vector.broadcast %cst_36 : f32 to vector<1x128xf32>
    %98 = arith.divf %96, %97 : vector<1x128xf32>
    %99 = vector.broadcast %98 : vector<1x128xf32> to vector<16x128xf32>
    %100 = arith.subf %94, %99 : vector<16x128xf32>
    %101 = arith.mulf %100, %100 : vector<16x128xf32>
    %cst_37 = arith.constant dense<0.000000e+00> : vector<128xf32>
    %102 = vector.multi_reduction <add>, %101, %cst_37 [0] : vector<16x128xf32> to vector<128xf32>
    %103 = vector.shape_cast %102 : vector<128xf32> to vector<1x128xf32>
    %cst_38 = arith.constant 1.600000e+01 : f32
    %104 = vector.broadcast %cst_38 : f32 to vector<1x128xf32>
    %105 = arith.divf %103, %104 : vector<1x128xf32>
    %106 = vector.broadcast %98 : vector<1x128xf32> to vector<16x128xf32>
    %107 = arith.subf %94, %106 : vector<16x128xf32>
    %cst_39 = arith.constant 9.99999974E-6 : f32
    %108 = vector.broadcast %cst_39 : f32 to vector<1x128xf32>
    %109 = arith.addf %105, %108 : vector<1x128xf32>
    %110 = math.rsqrt %109 : vector<1x128xf32>
    %111 = vector.broadcast %110 : vector<1x128xf32> to vector<16x128xf32>
    %112 = arith.mulf %107, %111 : vector<16x128xf32>
    %113 = vector.broadcast %47 : vector<1x128xf32> to vector<16x128xf32>
    %114 = arith.mulf %112, %113 : vector<16x128xf32>
    %115 = vector.broadcast %48 : vector<1x128xf32> to vector<16x128xf32>
    %116 = arith.addf %114, %115 : vector<16x128xf32>
    %c0_40 = arith.constant 0 : index
    %c0_41 = arith.constant 0 : index
    %117 = vector.load %arg10[%c0_40, %c0_41] : memref<16x128xf32, #tpu.memory_space<vmem>>, vector<16x128xf32>
    tpu.vector_store %arg10[%c0_40, %c0_41], %116 {strides = array<i32>} : memref<16x128xf32, #tpu.memory_space<vmem>>, vector<16x128xf32>,
    return
  }
}

</mosaic_0001>

<llo_original>
// kernel: tpu_custom_call.1
$region0: #{tpu_custom_call.1}
  #allocation0 [shape = 'u32[]', space=smem, size = 0x4, offset = 0x4, fixed_abs, tag = 'smem constant byte address 0x4 - core index']
  #allocation1 [shape = 'u32[144,128]{1,0:T(1,128)}', space=vmem, size = 0x12000, scoped, tag = 'internal scratch']
  #allocation2 [shape = 'bf16[128,512]{1,0:T(8,128)(2,1)}', space=vmem, size = 0x20000, scoped, tag = 'scratch operand']
  #allocation3 [shape = 'bf16[512,128]{1,0:T(8,128)(2,1)}', space=vmem, size = 0x20000, scoped, tag = 'scratch operand']
  #allocation4 [shape = 's32[2]{0}', space=sflag, size = 0x8, scoped, tag = 'scratch operand']
  #allocation9 [shape = 's32[]', space=sflag, size = 0x4, offset = 0, fixed_abs, tag = 'sflag constant byte address 0x0 - dummy sync flag']
  #allocation10 [shape = 's32[]', space=sflag, size = 0x4, offset = 0, fixed_abs, tag = 'sflag constant byte address 0x0 - dummy sync flag']
  #allocation11 [shape = 'u32[]', space=smem, size = 0x4, offset = 0x44, fixed_abs, tag = 'smem constant byte address 0x44 - assertion arg 0']
  #allocation12 [shape = 'u32[]', space=smem, size = 0x4, offset = 0x48, fixed_abs, tag = 'smem constant byte address 0x48 - assertion arg 1']
  #allocation13 [shape = 's32[]', space=sflag, size = 0x4, offset = 0, fixed_abs, tag = 'sflag constant byte address 0x0 - dummy sync flag']
  #allocation14 [shape = 's32[]', space=sflag, size = 0x4, offset = 0, fixed_abs, tag = 'sflag constant byte address 0x0 - dummy sync flag']
  %s0 = inlined_call_operand.vmem [shape: f32[16,128], index: 0, kind: input, shape index: {}]
  %s1 = inlined_call_operand.hbm [shape: bf16[128,384], index: 1, kind: input, shape index: {}]
  %s2 = inlined_call_operand.vmem [shape: f32[1,384], index: 2, kind: input, shape index: {}]
  %s3 = inlined_call_operand.vmem [shape: bf16[128,128], index: 3, kind: input, shape index: {}]
  %s4 = inlined_call_operand.vmem [shape: f32[128,8], index: 4, kind: input, shape index: {}]
  %s5 = inlined_call_operand.vmem [shape: f32[8,128], index: 5, kind: input, shape index: {}]
  %s6 = inlined_call_operand.vmem [shape: f32[8,128], index: 6, kind: input, shape index: {}]
  %s7 = inlined_call_operand.vmem [shape: f32[1,512], index: 7, kind: input, shape index: {}]
  %s8 = inlined_call_operand.hbm [shape: bf16[128,512], index: 8, kind: input, shape index: {}]
  %s9 = inlined_call_operand.hbm [shape: bf16[512,128], index: 9, kind: input, shape index: {}]
  %s10 = inlined_call_operand.hbm [shape: f32[16,128], index: 10, kind: output, shape index: {}]
  %s11 = sld [smem:[#allocation0]]
  $region54: #{tpu_custom_call.1} parent=0
    _
  %s13 = ssub.s32 1, %s11
  %s14 = scalar_select 0, %s13, %s11
  $region1: #{tpu_custom_call.1} parent=0
    #allocation5 [shape = 'u8[98304]{0}', space=vmem, size = 0x18000, scoped, tag = 'input window, operand 1, single buffered']
    #allocation6 [shape = 's32[1]{0}', space=sflag, size = 0x4, scoped, tag = 'scoped memory for tpu_custom_call.1']
    #allocation7 [shape = 's32[1]{0}', space=sflag, size = 0x4, scoped, tag = 'scoped memory for tpu_custom_call.1']
    #allocation8 [shape = 'u8[8192]{0}', space=vmem, size = 0x2000, scoped, tag = 'output window, operand 0, single buffered']
    %15 = vsyncpa [#allocation6], 0
    %16 = vsyncpa [#allocation7], 0
    // Predicated region
    $region2: #{tpu_custom_call.1} parent=1 // pred_check
      _
    $region3: #{tpu_custom_call.1} parent=1 // pred_check_branch
      %18 = sbr.rel (0) target = $region5
    $region4: #{tpu_custom_call.1} parent=1 // pred_region
      _
    $region5: #{tpu_custom_call.1} parent=1 // pred_fallthru
      _
    // Predicated region
    $region6: #{tpu_custom_call.1} parent=1 // pred_check
      _
    $region7: #{tpu_custom_call.1} parent=1 // pred_check_branch
      %20 = sbr.rel (0) target = $region9
    $region8: #{tpu_custom_call.1} parent=1 // pred_region
      %s22 = ssub.s32 3072, 3072
      %23 = vsyncadd [#allocation6], %s22
      %s24 = sshll.u32 [#allocation5], 4
      %s25 = int_to_ptr.vmem [resolvable:$true] %s24
      %30 = dma.hbm_to_vmem [thread:$0]  %s1, 3072, %s25, [#allocation6], 192, 192, 12
    $region9: #{tpu_custom_call.1} parent=1 // pred_fallthru
      _
    // Predicated region
    $region10: #{tpu_custom_call.1} parent=1 // pred_check
      _
    $region11: #{tpu_custom_call.1} parent=1 // pred_check_branch
      %32 = sbr.rel (0) target = $region13
    $region12: #{tpu_custom_call.1} parent=1 // pred_region
      _
    $region13: #{tpu_custom_call.1} parent=1 // pred_fallthru
      _
    // Predicated region
    $region14: #{tpu_custom_call.1} parent=1 // pred_check
      _
    $region15: #{tpu_custom_call.1} parent=1 // pred_check_branch
      %34 = sbr.rel (0) target = $region17
    $region16: #{tpu_custom_call.1} parent=1 // pred_region
      _
    $region17: #{tpu_custom_call.1} parent=1 // pred_fallthru
      _
    // Predicated region
    $region18: #{tpu_custom_call.1} parent=1 // pred_check
      _
    $region19: #{tpu_custom_call.1} parent=1 // pred_check_branch
      %36 = sbr.rel (0) target = $region21
    $region20: #{tpu_custom_call.1} parent=1 // pred_region
      _
    $region21: #{tpu_custom_call.1} parent=1 // pred_fallthru
      _
    // Predicated region
    $region22: #{tpu_custom_call.1} parent=1 // pred_check
      _
    $region23: #{tpu_custom_call.1} parent=1 // pred_check_branch
      %38 = sbr.rel (0) target = $region25
    $region24: #{tpu_custom_call.1} parent=1 // pred_region
      _
    $region25: #{tpu_custom_call.1} parent=1 // pred_fallthru
      _
    // Predicated region
    $region26: #{tpu_custom_call.1} parent=1 // pred_check
      _
    $region27: #{tpu_custom_call.1} parent=1 // pred_check_branch
      %40 = sbr.rel (0) target = $region29
    $region28: #{tpu_custom_call.1} parent=1 // pred_region
      _
    $region29: #{tpu_custom_call.1} parent=1 // pred_fallthru
      _
    // Predicated region
    $region30: #{tpu_custom_call.1} parent=1 // pred_check
      _
    $region31: #{tpu_custom_call.1} parent=1 // pred_check_branch
      %42 = sbr.rel (0) target = $region33
    $region32: #{tpu_custom_call.1} parent=1 // pred_region
      _
    $region33: #{tpu_custom_call.1} parent=1 // pred_fallthru
      _
    // Predicated region
    $region34: #{tpu_custom_call.1} parent=1 // pred_check
      _
    $region35: #{tpu_custom_call.1} parent=1 // pred_check_branch
      %44 = sbr.rel (0) target = $region37
    $region36: #{tpu_custom_call.1} parent=1 // pred_region
      %45 = dma.done [#allocation6], 3072
    $region37: #{tpu_custom_call.1} parent=1 // pred_fallthru
      _
    // Predicated region
    $region38: #{tpu_custom_call.1} parent=1 // pred_check
      _
    $region39: #{tpu_custom_call.1} parent=1 // pred_check_branch
      %48 = sbr.rel target = $region41
    $region40: #{tpu_custom_call.1} parent=1 // pred_region
      %49 = sst [smem:[#allocation11]] [#allocation10]
      %50 = sst [smem:[#allocation12]] [#allocation9]
    $region41: #{tpu_custom_call.1} parent=1 // pred_fallthru
      _
    %52 = shalt.err (0)
    %s54 = sshll.u32 [#allocation2], 4
    %s55 = int_to_ptr.vmem [resolvable:$true] %s54
    %57 = dma.hbm_to_vmem [thread:$0]  %s8, 4096, %s55, [#allocation4]
    %s58 = scalar_lea.sflag [#allocation4], 1
    // Predicated region
    $region42: #{tpu_custom_call.1} parent=1 // pred_check
      _
    $region43: #{tpu_custom_call.1} parent=1 // pred_check_branch
      %60 = sbr.rel target = $region45
    $region44: #{tpu_custom_call.1} parent=1 // pred_region
      %61 = sst [smem:[#allocation11]] [#allocation14]
      %62 = sst [smem:[#allocation12]] [#allocation13]
    $region45: #{tpu_custom_call.1} parent=1 // pred_fallthru
      _
    %64 = shalt.err (0)
    %s66 = sshll.u32 [#allocation3], 4
    %s67 = int_to_ptr.vmem [resolvable:$true] %s66
    %69 = dma.hbm_to_vmem [thread:$0]  %s9, 4096, %s67, %s58
    %v70 = vld [vmem:[%s0] sm:$0xff]
    %v71 = vld [vmem:[%s0 + $0x8] sm:$0xff]
    %v72 = vpack.c.bf16 %v71, %v70
    %v73 = vld [vmem:[#allocation5] sm:$0xff]
    %v74 = vld [vmem:[#allocation5 + $0x8] sm:$0xf]
    %v75 = vld [vmem:[#allocation5 + $0xc] sm:$0xff]
    %v76 = vld [vmem:[#allocation5 + $0x14] sm:$0xf]
    %v77 = vld [vmem:[#allocation5 + $0x18] sm:$0xff]
    %v78 = vld [vmem:[#allocation5 + $0x20] sm:$0xf]
    %v79 = vld [vmem:[#allocation5 + $0x24] sm:$0xff]
    %v80 = vld [vmem:[#allocation5 + $0x2c] sm:$0xf]
    %v81 = vld [vmem:[#allocation5 + $0x30] sm:$0xff]
    %v82 = vld [vmem:[#allocation5 + $0x38] sm:$0xf]
    %v83 = vld [vmem:[#allocation5 + $0x3c] sm:$0xff]
    %v84 = vld [vmem:[#allocation5 + $0x44] sm:$0xf]
    %v85 = vld [vmem:[#allocation5 + $0x48] sm:$0xff]
    %v86 = vld [vmem:[#allocation5 + $0x50] sm:$0xf]
    %v87 = vld [vmem:[#allocation5 + $0x54] sm:$0xff]
    %v88 = vld [vmem:[#allocation5 + $0x5c] sm:$0xf]
    %v89 = vld [vmem:[#allocation5 + $0x60] sm:$0xff]
    %v90 = vld [vmem:[#allocation5 + $0x68] sm:$0xf]
    %v91 = vld [vmem:[#allocation5 + $0x6c] sm:$0xff]
    %v92 = vld [vmem:[#allocation5 + $0x74] sm:$0xf]
    %v93 = vld [vmem:[#allocation5 + $0x78] sm:$0xff]
    %v94 = vld [vmem:[#allocation5 + $0x80] sm:$0xf]
    %v95 = vld [vmem:[#allocation5 + $0x84] sm:$0xff]
    %v96 = vld [vmem:[#allocation5 + $0x8c] sm:$0xf]
    %v97 = vld [vmem:[#allocation5 + $0x90] sm:$0xff]
    %v98 = vld [vmem:[#allocation5 + $0x98] sm:$0xf]
    %v99 = vld [vmem:[#allocation5 + $0x9c] sm:$0xff]
    %v100 = vld [vmem:[#allocation5 + $0xa4] sm:$0xf]
    %v101 = vld [vmem:[#allocation5 + $0xa8] sm:$0xff]
    %v102 = vld [vmem:[#allocation5 + $0xb0] sm:$0xf]
    %v103 = vld [vmem:[#allocation5 + $0xb4] sm:$0xff]
    %v104 = vld [vmem:[#allocation5 + $0xbc] sm:$0xf]
    %v105 = vld [vmem:[%s2] sm:$0x7]
    %v107 = vlaneseq
    %v108 = vshrl.u32 %v107, 7
    %v109 = vsub.s32 0, %v108
    %v110 = vrot.slane %v105, %v109
    %v111 = vlaneseq
    %v112 = vshrl.u32 %v111, 7
    %v113 = vsub.s32 1, %v112
    %v114 = vrot.slane %v105, %v113
    %v115 = vlaneseq
    %v116 = vshrl.u32 %v115, 7
    %v117 = vsub.s32 2, %v116
    %v118 = vrot.slane %v105, %v117
    %v154 = vunpack.c.l.b16 %v73
    %v155 = vunpack.c.h.b16 %v73
    %v156 = vunpack.c.l.b16 %v74
    %v157 = vunpack.c.l.b16 %v75
    %v158 = vunpack.c.h.b16 %v75
    %v159 = vunpack.c.l.b16 %v76
    %v160 = vunpack.c.l.b16 %v77
    %v161 = vunpack.c.h.b16 %v77
    %v162 = vunpack.c.l.b16 %v78
    %v163 = vunpack.c.l.b16 %v79
    %v164 = vunpack.c.h.b16 %v79
    %v165 = vunpack.c.l.b16 %v80
    %v166 = vunpack.c.l.b16 %v81
    %v167 = vunpack.c.h.b16 %v81
    %v168 = vunpack.c.l.b16 %v82
    %v169 = vunpack.c.l.b16 %v83
    %v170 = vunpack.c.h.b16 %v83
    %v171 = vunpack.c.l.b16 %v84
    %v172 = vunpack.c.l.b16 %v85
    %v173 = vunpack.c.h.b16 %v85
    %v174 = vunpack.c.l.b16 %v86
    %v175 = vunpack.c.l.b16 %v87
    %v176 = vunpack.c.h.b16 %v87
    %v177 = vunpack.c.l.b16 %v88
    %v178 = vunpack.c.l.b16 %v89
    %v179 = vunpack.c.h.b16 %v89
    %v180 = vunpack.c.l.b16 %v90
    %v181 = vunpack.c.l.b16 %v91
    %v182 = vunpack.c.h.b16 %v91
    %v183 = vunpack.c.l.b16 %v92
    %v184 = vunpack.c.l.b16 %v93
    %v185 = vunpack.c.h.b16 %v93
    %v186 = vunpack.c.l.b16 %v94
    %v187 = vunpack.c.l.b16 %v95
    %v188 = vunpack.c.h.b16 %v95
    %v189 = vunpack.c.l.b16 %v96
    %v190 = vunpack.c.l.b16 %v97
    %v191 = vunpack.c.h.b16 %v97
    %v192 = vunpack.c.l.b16 %v98
    %v193 = vunpack.c.l.b16 %v99
    %v194 = vunpack.c.h.b16 %v99
    %v195 = vunpack.c.l.b16 %v100
    %v196 = vunpack.c.l.b16 %v101
    %v197 = vunpack.c.h.b16 %v101
    %v198 = vunpack.c.l.b16 %v102
    %v199 = vunpack.c.l.b16 %v103
    %v200 = vunpack.c.h.b16 %v103
    %v201 = vunpack.c.l.b16 %v104
    %v202 = vpack.c.b16 %v157, %v154
    %v203 = vpack.c.b16 %v158, %v155
    %v204 = vpack.c.b16 %v159, %v156
    %v205 = vpack.c.b16 %v163, %v160
    %v206 = vpack.c.b16 %v164, %v161
    %v207 = vpack.c.b16 %v165, %v162
    %v208 = vpack.c.b16 %v169, %v166
    %v209 = vpack.c.b16 %v170, %v167
    %v210 = vpack.c.b16 %v171, %v168
    %v211 = vpack.c.b16 %v175, %v172
    %v212 = vpack.c.b16 %v176, %v173
    %v213 = vpack.c.b16 %v177, %v174
    %v214 = vpack.c.b16 %v181, %v178
    %v215 = vpack.c.b16 %v182, %v179
    %v216 = vpack.c.b16 %v183, %v180
    %v217 = vpack.c.b16 %v187, %v184
    %v218 = vpack.c.b16 %v188, %v185
    %v219 = vpack.c.b16 %v189, %v186
    %v220 = vpack.c.b16 %v193, %v190
    %v221 = vpack.c.b16 %v194, %v191
    %v222 = vpack.c.b16 %v195, %v192
    %v223 = vpack.c.b16 %v199, %v196
    %v224 = vpack.c.b16 %v200, %v197
    %v225 = vpack.c.b16 %v201, %v198
    %250 = vmatprep.subr.bf16.mxu0 %v224
    %251 = vmatpush1.bf16.msra.mxu0 %v223
    %252 = vmatprep.subr.bf16.mxu0 %v221
    %253 = vmatpush1.bf16.msra.mxu0 %v220
    %254 = vmatprep.subr.bf16.mxu0 %v218
    %255 = vmatpush1.bf16.msra.mxu0 %v217
    %256 = vmatprep.subr.bf16.mxu0 %v215
    %257 = vmatpush1.bf16.msra.mxu0 %v214
    %258 = vmatprep.subr.bf16.mxu0 %v212
    %259 = vmatpush1.bf16.msra.mxu0 %v211
    %260 = vmatprep.subr.bf16.mxu0 %v209
    %261 = vmatpush1.bf16.msra.mxu0 %v208
    %262 = vmatprep.subr.bf16.mxu0 %v206
    %263 = vmatpush1.bf16.msra.mxu0 %v205
    %264 = vmatprep.subr.bf16.mxu0 %v203
    %265 = vmatpush1.bf16.msra.mxu0 %v202
    %266 = vmatprep.subr.bf16.mxu0 0
    %267 = vmatpush2.bf16.msra.mxu0 0
    %268 = vmatprep.subr.bf16.mxu0 0
    %269 = vmatpush2.bf16.msra.mxu0 0
    %270 = vmatprep.subr.bf16.mxu0 0
    %271 = vmatpush2.bf16.msra.mxu0 0
    %272 = vmatprep.subr.bf16.mxu0 0
    %273 = vmatpush2.bf16.msra.mxu0 0
    %274 = vmatprep.subr.bf16.mxu0 0
    %275 = vmatpush2.bf16.msra.mxu0 0
    %276 = vmatprep.subr.bf16.mxu0 0
    %277 = vmatpush2.bf16.msra.mxu0 0
    %278 = vmatprep.subr.bf16.mxu0 0
    %279 = vmatpush2.bf16.msra.mxu0 0
    %280 = vmatprep.subr.bf16.mxu0 0
    %281 = vmatpush2.bf16.msra.mxu0 0
    %282 = vmatprep.mubr.bf16.mxu0 0
    %283 = vmatmul.mubr.bf16.gmra.mxu0 %v72
    %v284 = vpop.f32.mrf.mxu0
    %v285 = vadd.f32 %v110, %v284
    %v286 = vpop.f32.mrf.mxu0
    %v287 = vadd.f32 %v114, %v286
    %v288 = vpop.f32.mrf.mxu0
    %v289 = vadd.f32 %v110, %v288
    %v290 = vpop.f32.mrf.mxu0
    %v291 = vadd.f32 %v114, %v290
    %292 = vdwg.mxu0
    %293 = vmatprep.subr.bf16.mxu0 0
    %294 = vmatpush1.bf16.msra.mxu0 %v225
    %295 = vmatprep.subr.bf16.mxu0 0
    %296 = vmatpush1.bf16.msra.mxu0 %v222
    %297 = vmatprep.subr.bf16.mxu0 0
    %298 = vmatpush1.bf16.msra.mxu0 %v219
    %299 = vmatprep.subr.bf16.mxu0 0
    %300 = vmatpush1.bf16.msra.mxu0 %v216
    %301 = vmatprep.subr.bf16.mxu0 0
    %302 = vmatpush1.bf16.msra.mxu0 %v213
    %303 = vmatprep.subr.bf16.mxu0 0
    %304 = vmatpush1.bf16.msra.mxu0 %v210
    %305 = vmatprep.subr.bf16.mxu0 0
    %306 = vmatpush1.bf16.msra.mxu0 %v207
    %307 = vmatprep.subr.bf16.mxu0 0
    %308 = vmatpush1.bf16.msra.mxu0 %v204
    %309 = vmatprep.subr.bf16.mxu0 0
    %310 = vmatpush2.bf16.msra.mxu0 0
    %311 = vmatprep.subr.bf16.mxu0 0
    %312 = vmatpush2.bf16.msra.mxu0 0
    %313 = vmatprep.subr.bf16.mxu0 0
    %314 = vmatpush2.bf16.msra.mxu0 0
    %315 = vmatprep.subr.bf16.mxu0 0
    %316 = vmatpush2.bf16.msra.mxu0 0
    %317 = vmatprep.subr.bf16.mxu0 0
    %318 = vmatpush2.bf16.msra.mxu0 0
    %319 = vmatprep.subr.bf16.mxu0 0
    %320 = vmatpush2.bf16.msra.mxu0 0
    %321 = vmatprep.subr.bf16.mxu0 0
    %322 = vmatpush2.bf16.msra.mxu0 0
    %323 = vmatprep.subr.bf16.mxu0 0
    %324 = vmatpush2.bf16.msra.mxu0 0
    %325 = vmatprep.mubr.bf16.mxu0 0
    %326 = vmatmul.mubr.bf16.gmra.mxu0 %v72
    %v327 = vpop.f32.mrf.mxu0
    %v328 = vadd.f32 %v118, %v327
    %v329 = vpop.f32.mrf.mxu0
    %v330 = vpop.f32.mrf.mxu0
    %v331 = vadd.f32 %v118, %v330
    %v332 = vpop.f32.mrf.mxu0
    %333 = vdwg.mxu0
    %v336 = vcombine.high %v285, %v285
    %v338 = vunpack.c.l.s4 1966171168
    %v339 = vunpack.c.0.s8 %v338
    %v340 = vlaneseq
    %v341 = vshrl.u32 %v340, 7
    %v342 = vsub.s32 %v339, %v341
    %v343 = vrot.slane %v285, %v342
    %v345 = vunpack.c.l.s4 1966171168
    %v346 = vunpack.c.0.s8 %v345
    %v347 = vlaneseq
    %v348 = vshrl.u32 %v347, 7
    %v349 = vsub.s32 %v346, %v348
    %v350 = vrot.slane %v336, %v349
    %v351 = vcombine.high %v343, %v343
    %v352 = vcombine.high %v350, %v350
    %v354 = vunpack.c.l.s4 1966171168
    %v355 = vunpack.c.0.s8 %v354
    %v356 = vlaneseq
    %v357 = vshrl.u32 %v356, 7
    %v358 = vsub.s32 %v355, %v357
    %v359 = vrot.slane %v343, %v358
    %v361 = vunpack.c.l.s4 1966171168
    %v362 = vunpack.c.0.s8 %v361
    %v363 = vlaneseq
    %v364 = vshrl.u32 %v363, 7
    %v365 = vsub.s32 %v362, %v364
    %v366 = vrot.slane %v350, %v365
    %v368 = vunpack.c.l.s4 1966171168
    %v369 = vunpack.c.0.s8 %v368
    %v370 = vlaneseq
    %v371 = vshrl.u32 %v370, 7
    %v372 = vsub.s32 %v369, %v371
    %v373 = vrot.slane %v351, %v372
    %v375 = vunpack.c.l.s4 1966171168
    %v376 = vunpack.c.0.s8 %v375
    %v377 = vlaneseq
    %v378 = vshrl.u32 %v377, 7
    %v379 = vsub.s32 %v376, %v378
    %v380 = vrot.slane %v352, %v379
    %v381 = vcombine.high %v359, %v359
    %v382 = vcombine.high %v366, %v366
    %v383 = vcombine.high %v373, %v373
    %v384 = vcombine.high %v380, %v380
    %v385 = vcombine.high %v289, %v289
    %v387 = vunpack.c.l.s4 1966171168
    %v388 = vunpack.c.0.s8 %v387
    %v389 = vlaneseq
    %v390 = vshrl.u32 %v389, 7
    %v391 = vsub.s32 %v388, %v390
    %v392 = vrot.slane %v289, %v391
    %v394 = vunpack.c.l.s4 1966171168
    %v395 = vunpack.c.0.s8 %v394
    %v396 = vlaneseq
    %v397 = vshrl.u32 %v396, 7
    %v398 = vsub.s32 %v395, %v397
    %v399 = vrot.slane %v385, %v398
    %v400 = vcombine.high %v392, %v392
    %v401 = vcombine.high %v399, %v399
    %v403 = vunpack.c.l.s4 1966171168
    %v404 = vunpack.c.0.s8 %v403
    %v405 = vlaneseq
    %v406 = vshrl.u32 %v405, 7
    %v407 = vsub.s32 %v404, %v406
    %v408 = vrot.slane %v392, %v407
    %v410 = vunpack.c.l.s4 1966171168
    %v411 = vunpack.c.0.s8 %v410
    %v412 = vlaneseq
    %v413 = vshrl.u32 %v412, 7
    %v414 = vsub.s32 %v411, %v413
    %v415 = vrot.slane %v399, %v414
    %v417 = vunpack.c.l.s4 1966171168
    %v418 = vunpack.c.0.s8 %v417
    %v419 = vlaneseq
    %v420 = vshrl.u32 %v419, 7
    %v421 = vsub.s32 %v418, %v420
    %v422 = vrot.slane %v400, %v421
    %v424 = vunpack.c.l.s4 1966171168
    %v425 = vunpack.c.0.s8 %v424
    %v426 = vlaneseq
    %v427 = vshrl.u32 %v426, 7
    %v428 = vsub.s32 %v425, %v427
    %v429 = vrot.slane %v401, %v428
    %v430 = vcombine.high %v408, %v408
    %v431 = vcombine.high %v415, %v415
    %v432 = vcombine.high %v422, %v422
    %v433 = vcombine.high %v429, %v429
    %v434 = vlaneseq
    %v435 = vshrl.u32 %v434, 7
    %v436 = vsub.s32 0, %v435
    %v437 = vrot.slane %v359, %v436
    %v438 = vlaneseq
    %v439 = vshrl.u32 %v438, 7
    %v440 = vsub.s32 0, %v439
    %v441 = vrot.slane %v373, %v440
    %v442 = vlaneseq
    %v443 = vshrl.u32 %v442, 7
    %v444 = vsub.s32 0, %v443
    %v445 = vrot.slane %v381, %v444
    %v446 = vlaneseq
    %v447 = vshrl.u32 %v446, 7
    %v448 = vsub.s32 0, %v447
    %v449 = vrot.slane %v383, %v448
    %v450 = vlaneseq
    %v451 = vshrl.u32 %v450, 7
    %v452 = vsub.s32 0, %v451
    %v453 = vrot.slane %v366, %v452
    %v454 = vlaneseq
    %v455 = vshrl.u32 %v454, 7
    %v456 = vsub.s32 0, %v455
    %v457 = vrot.slane %v380, %v456
    %v458 = vlaneseq
    %v459 = vshrl.u32 %v458, 7
    %v460 = vsub.s32 0, %v459
    %v461 = vrot.slane %v382, %v460
    %v462 = vlaneseq
    %v463 = vshrl.u32 %v462, 7
    %v464 = vsub.s32 0, %v463
    %v465 = vrot.slane %v384, %v464
    %v466 = vlaneseq
    %v467 = vshrl.u32 %v466, 7
    %v468 = vsub.s32 0, %v467
    %v469 = vrot.slane %v408, %v468
    %v470 = vlaneseq
    %v471 = vshrl.u32 %v470, 7
    %v472 = vsub.s32 0, %v471
    %v473 = vrot.slane %v422, %v472
    %v474 = vlaneseq
    %v475 = vshrl.u32 %v474, 7
    %v476 = vsub.s32 0, %v475
    %v477 = vrot.slane %v430, %v476
    %v478 = vlaneseq
    %v479 = vshrl.u32 %v478, 7
    %v480 = vsub.s32 0, %v479
    %v481 = vrot.slane %v432, %v480
    %v482 = vlaneseq
    %v483 = vshrl.u32 %v482, 7
    %v484 = vsub.s32 0, %v483
    %v485 = vrot.slane %v415, %v484
    %v486 = vlaneseq
    %v487 = vshrl.u32 %v486, 7
    %v488 = vsub.s32 0, %v487
    %v489 = vrot.slane %v429, %v488
    %v490 = vlaneseq
    %v491 = vshrl.u32 %v490, 7
    %v492 = vsub.s32 0, %v491
    %v493 = vrot.slane %v431, %v492
    %v494 = vlaneseq
    %v495 = vshrl.u32 %v494, 7
    %v496 = vsub.s32 0, %v495
    %v497 = vrot.slane %v433, %v496
    %v514 = vmul.f32 %v437, %v287
    %v515 = vmul.f32 %v441, %v287
    %v516 = vmul.f32 %v445, %v287
    %v517 = vmul.f32 %v449, %v287
    %v518 = vmul.f32 %v453, %v287
    %v519 = vmul.f32 %v457, %v287
    %v520 = vmul.f32 %v461, %v287
    %v521 = vmul.f32 %v465, %v287
    %v522 = vmul.f32 %v469, %v291
    %v523 = vmul.f32 %v473, %v291
    %v524 = vmul.f32 %v477, %v291
    %v525 = vmul.f32 %v481, %v291
    %v526 = vmul.f32 %v485, %v291
    %v527 = vmul.f32 %v489, %v291
    %v528 = vmul.f32 %v493, %v291
    %v529 = vmul.f32 %v497, %v291
    %v530 = vld [vmem:[%s4] sm:$0xff]
    %v531 = vld [vmem:[%s4 + $0x8] sm:$0xff]
    %v532 = vld [vmem:[%s4 + $0x10] sm:$0xff]
    %v533 = vld [vmem:[%s4 + $0x18] sm:$0xff]
    %v534 = vld [vmem:[%s4 + $0x20] sm:$0xff]
    %v535 = vld [vmem:[%s4 + $0x28] sm:$0xff]
    %v536 = vld [vmem:[%s4 + $0x30] sm:$0xff]
    %v537 = vld [vmem:[%s4 + $0x38] sm:$0xff]
    %v538 = vld [vmem:[%s4 + $0x40] sm:$0xff]
    %v539 = vld [vmem:[%s4 + $0x48] sm:$0xff]
    %v540 = vld [vmem:[%s4 + $0x50] sm:$0xff]
    %v541 = vld [vmem:[%s4 + $0x58] sm:$0xff]
    %v542 = vld [vmem:[%s4 + $0x60] sm:$0xff]
    %v543 = vld [vmem:[%s4 + $0x68] sm:$0xff]
    %v544 = vld [vmem:[%s4 + $0x70] sm:$0xff]
    %v545 = vld [vmem:[%s4 + $0x78] sm:$0xff]
    %546 = vmatprep.subr.mxu0 0.0
    %547 = vmatpush1.msra.mxu0 %v545
    %548 = vmatprep.subr.mxu0 0.0
    %549 = vmatpush1.msra.mxu0 %v544
    %550 = vmatprep.subr.mxu0 0.0
    %551 = vmatpush1.msra.mxu0 %v543
    %552 = vmatprep.subr.mxu0 0.0
    %553 = vmatpush1.msra.mxu0 %v542
    %554 = vmatprep.subr.mxu0 0.0
    %555 = vmatpush1.msra.mxu0 %v541
    %556 = vmatprep.subr.mxu0 0.0
    %557 = vmatpush1.msra.mxu0 %v540
    %558 = vmatprep.subr.mxu0 0.0
    %559 = vmatpush1.msra.mxu0 %v539
    %560 = vmatprep.subr.mxu0 0.0
    %561 = vmatpush1.msra.mxu0 %v538
    %562 = vmatprep.subr.mxu0 0.0
    %563 = vmatpush1.msra.mxu0 %v537
    %564 = vmatprep.subr.mxu0 0.0
    %565 = vmatpush1.msra.mxu0 %v536
    %566 = vmatprep.subr.mxu0 0.0
    %567 = vmatpush1.msra.mxu0 %v535
    %568 = vmatprep.subr.mxu0 0.0
    %569 = vmatpush1.msra.mxu0 %v534
    %570 = vmatprep.subr.mxu0 0.0
    %571 = vmatpush1.msra.mxu0 %v533
    %572 = vmatprep.subr.mxu0 0.0
    %573 = vmatpush1.msra.mxu0 %v532
    %574 = vmatprep.subr.mxu0 0.0
    %575 = vmatpush1.msra.mxu0 %v531
    %576 = vmatprep.subr.mxu0 0.0
    %577 = vmatpush1.msra.mxu0 %v530
    %578 = vmatprep.subr.mxu0 0.0
    %579 = vmatpush2.msra.mxu0 0.0
    %580 = vmatprep.subr.mxu0 0.0
    %581 = vmatpush2.msra.mxu0 0.0
    %582 = vmatprep.subr.mxu0 0.0
    %583 = vmatpush2.msra.mxu0 0.0
    %584 = vmatprep.subr.mxu0 0.0
    %585 = vmatpush2.msra.mxu0 0.0
    %586 = vmatprep.subr.mxu0 0.0
    %587 = vmatpush2.msra.mxu0 0.0
    %588 = vmatprep.subr.mxu0 0.0
    %589 = vmatpush2.msra.mxu0 0.0
    %590 = vmatprep.subr.mxu0 0.0
    %591 = vmatpush2.msra.mxu0 0.0
    %592 = vmatprep.subr.mxu0 0.0
    %593 = vmatpush2.msra.mxu0 0.0
    %594 = vmatprep.subr.mxu0 0.0
    %595 = vmatpush2.msra.mxu0 0.0
    %596 = vmatprep.subr.mxu0 0.0
    %597 = vmatpush2.msra.mxu0 0.0
    %598 = vmatprep.subr.mxu0 0.0
    %599 = vmatpush2.msra.mxu0 0.0
    %600 = vmatprep.subr.mxu0 0.0
    %601 = vmatpush2.msra.mxu0 0.0
    %602 = vmatprep.subr.mxu0 0.0
    %603 = vmatpush2.msra.mxu0 0.0
    %604 = vmatprep.subr.mxu0 0.0
    %605 = vmatpush2.msra.mxu0 0.0
    %606 = vmatprep.subr.mxu0 0.0
    %607 = vmatpush2.msra.mxu0 0.0
    %608 = vmatprep.subr.mxu0 0.0
    %609 = vmatpush2.msra.mxu0 0.0
    %610 = vmatprep.mubr.f32.mxu0 0.0
    %611 = vmatmul.mubr.f32.gmra.mxu0 %v514
    %v612 = vpop.f32.mrf.mxu0
    %v613 = vadd.f32 0.0, %v612
    %v614 = vpop.f32.mrf.mxu0
    %615 = vmatprep.mubr.f32.mxu0 0.0
    %616 = vmatmul.mubr.f32.gmra.mxu0 %v515
    %v617 = vpop.f32.mrf.mxu0
    %v618 = vadd.f32 0.0, %v617
    %v619 = vpop.f32.mrf.mxu0
    %620 = vmatprep.mubr.f32.mxu0 0.0
    %621 = vmatmul.mubr.f32.gmra.mxu0 %v516
    %v622 = vpop.f32.mrf.mxu0
    %v623 = vadd.f32 0.0, %v622
    %v624 = vpop.f32.mrf.mxu0
    %625 = vmatprep.mubr.f32.mxu0 0.0
    %626 = vmatmul.mubr.f32.gmra.mxu0 %v517
    %v627 = vpop.f32.mrf.mxu0
    %v628 = vadd.f32 0.0, %v627
    %v629 = vpop.f32.mrf.mxu0
    %630 = vmatprep.mubr.f32.mxu0 0.0
    %631 = vmatmul.mubr.f32.gmra.mxu0 %v518
    %v632 = vpop.f32.mrf.mxu0
    %v633 = vadd.f32 0.0, %v632
    %v634 = vpop.f32.mrf.mxu0
    %635 = vmatprep.mubr.f32.mxu0 0.0
    %636 = vmatmul.mubr.f32.gmra.mxu0 %v519
    %v637 = vpop.f32.mrf.mxu0
    %v638 = vadd.f32 0.0, %v637
    %v639 = vpop.f32.mrf.mxu0
    %640 = vmatprep.mubr.f32.mxu0 0.0
    %641 = vmatmul.mubr.f32.gmra.mxu0 %v520
    %v642 = vpop.f32.mrf.mxu0
    %v643 = vadd.f32 0.0, %v642
    %v644 = vpop.f32.mrf.mxu0
    %645 = vmatprep.mubr.f32.mxu0 0.0
    %646 = vmatmul.mubr.f32.gmra.mxu0 %v521
    %v647 = vpop.f32.mrf.mxu0
    %v648 = vadd.f32 0.0, %v647
    %v649 = vpop.f32.mrf.mxu0
    %650 = vmatprep.mubr.f32.mxu0 0.0
    %651 = vmatmul.mubr.f32.gmra.mxu0 %v522
    %v652 = vpop.f32.mrf.mxu0
    %v653 = vadd.f32 0.0, %v652
    %v654 = vpop.f32.mrf.mxu0
    %655 = vmatprep.mubr.f32.mxu0 0.0
    %656 = vmatmul.mubr.f32.gmra.mxu0 %v523
    %v657 = vpop.f32.mrf.mxu0
    %v658 = vadd.f32 0.0, %v657
    %v659 = vpop.f32.mrf.mxu0
    %660 = vmatprep.mubr.f32.mxu0 0.0
    %661 = vmatmul.mubr.f32.gmra.mxu0 %v524
    %v662 = vpop.f32.mrf.mxu0
    %v663 = vadd.f32 0.0, %v662
    %v664 = vpop.f32.mrf.mxu0
    %665 = vmatprep.mubr.f32.mxu0 0.0
    %666 = vmatmul.mubr.f32.gmra.mxu0 %v525
    %v667 = vpop.f32.mrf.mxu0
    %v668 = vadd.f32 0.0, %v667
    %v669 = vpop.f32.mrf.mxu0
    %670 = vmatprep.mubr.f32.mxu0 0.0
    %671 = vmatmul.mubr.f32.gmra.mxu0 %v526
    %v672 = vpop.f32.mrf.mxu0
    %v673 = vadd.f32 0.0, %v672
    %v674 = vpop.f32.mrf.mxu0
    %675 = vmatprep.mubr.f32.mxu0 0.0
    %676 = vmatmul.mubr.f32.gmra.mxu0 %v527
    %v677 = vpop.f32.mrf.mxu0
    %v678 = vadd.f32 0.0, %v677
    %v679 = vpop.f32.mrf.mxu0
    %680 = vmatprep.mubr.f32.mxu0 0.0
    %681 = vmatmul.mubr.f32.gmra.mxu0 %v528
    %v682 = vpop.f32.mrf.mxu0
    %v683 = vadd.f32 0.0, %v682
    %v684 = vpop.f32.mrf.mxu0
    %685 = vmatprep.mubr.f32.mxu0 0.0
    %686 = vmatmul.mubr.f32.gmra.mxu0 %v529
    %v687 = vpop.f32.mrf.mxu0
    %v688 = vadd.f32 0.0, %v687
    %v689 = vpop.f32.mrf.mxu0
    %690 = vdwg.mxu0
    %vm691 = vcmask 64512
    %v692 = vsel %vm691, %v613, -inf
    %v693 = vrot.slane %v692, 4
    %v694 = vmax.f32 %v692, %v693
    %v695 = vrot.slane %v694, 2
    %v696 = vmax.f32 %v694, %v695
    %v697 = vrot.slane %v696, 1
    %v698 = vmax.f32 %v696, %v697
    %v699 = vsel %vm691, %v618, -inf
    %v700 = vrot.slane %v699, 4
    %v701 = vmax.f32 %v699, %v700
    %v702 = vrot.slane %v701, 2
    %v703 = vmax.f32 %v701, %v702
    %v704 = vrot.slane %v703, 1
    %v705 = vmax.f32 %v703, %v704
    %v706 = vsel %vm691, %v623, -inf
    %v707 = vrot.slane %v706, 4
    %v708 = vmax.f32 %v706, %v707
    %v709 = vrot.slane %v708, 2
    %v710 = vmax.f32 %v708, %v709
    %v711 = vrot.slane %v710, 1
    %v712 = vmax.f32 %v710, %v711
    %v713 = vsel %vm691, %v628, -inf
    %v714 = vrot.slane %v713, 4
    %v715 = vmax.f32 %v713, %v714
    %v716 = vrot.slane %v715, 2
    %v717 = vmax.f32 %v715, %v716
    %v718 = vrot.slane %v717, 1
    %v719 = vmax.f32 %v717, %v718
    %v720 = vsel %vm691, %v633, -inf
    %v721 = vrot.slane %v720, 4
    %v722 = vmax.f32 %v720, %v721
    %v723 = vrot.slane %v722, 2
    %v724 = vmax.f32 %v722, %v723
    %v725 = vrot.slane %v724, 1
    %v726 = vmax.f32 %v724, %v725
    %v727 = vsel %vm691, %v638, -inf
    %v728 = vrot.slane %v727, 4
    %v729 = vmax.f32 %v727, %v728
    %v730 = vrot.slane %v729, 2
    %v731 = vmax.f32 %v729, %v730
    %v732 = vrot.slane %v731, 1
    %v733 = vmax.f32 %v731, %v732
    %v734 = vsel %vm691, %v643, -inf
    %v735 = vrot.slane %v734, 4
    %v736 = vmax.f32 %v734, %v735
    %v737 = vrot.slane %v736, 2
    %v738 = vmax.f32 %v736, %v737
    %v739 = vrot.slane %v738, 1
    %v740 = vmax.f32 %v738, %v739
    %v741 = vsel %vm691, %v648, -inf
    %v742 = vrot.slane %v741, 4
    %v743 = vmax.f32 %v741, %v742
    %v744 = vrot.slane %v743, 2
    %v745 = vmax.f32 %v743, %v744
    %v746 = vrot.slane %v745, 1
    %v747 = vmax.f32 %v745, %v746
    %v748 = vsel %vm691, %v653, -inf
    %v749 = vrot.slane %v748, 4
    %v750 = vmax.f32 %v748, %v749
    %v751 = vrot.slane %v750, 2
    %v752 = vmax.f32 %v750, %v751
    %v753 = vrot.slane %v752, 1
    %v754 = vmax.f32 %v752, %v753
    %v755 = vsel %vm691, %v658, -inf
    %v756 = vrot.slane %v755, 4
    %v757 = vmax.f32 %v755, %v756
    %v758 = vrot.slane %v757, 2
    %v759 = vmax.f32 %v757, %v758
    %v760 = vrot.slane %v759, 1
    %v761 = vmax.f32 %v759, %v760
    %v762 = vsel %vm691, %v663, -inf
    %v763 = vrot.slane %v762, 4
    %v764 = vmax.f32 %v762, %v763
    %v765 = vrot.slane %v764, 2
    %v766 = vmax.f32 %v764, %v765
    %v767 = vrot.slane %v766, 1
    %v768 = vmax.f32 %v766, %v767
    %v769 = vsel %vm691, %v668, -inf
    %v770 = vrot.slane %v769, 4
    %v771 = vmax.f32 %v769, %v770
    %v772 = vrot.slane %v771, 2
    %v773 = vmax.f32 %v771, %v772
    %v774 = vrot.slane %v773, 1
    %v775 = vmax.f32 %v773, %v774
    %v776 = vsel %vm691, %v673, -inf
    %v777 = vrot.slane %v776, 4
    %v778 = vmax.f32 %v776, %v777
    %v779 = vrot.slane %v778, 2
    %v780 = vmax.f32 %v778, %v779
    %v781 = vrot.slane %v780, 1
    %v782 = vmax.f32 %v780, %v781
    %v783 = vsel %vm691, %v678, -inf
    %v784 = vrot.slane %v783, 4
    %v785 = vmax.f32 %v783, %v784
    %v786 = vrot.slane %v785, 2
    %v787 = vmax.f32 %v785, %v786
    %v788 = vrot.slane %v787, 1
    %v789 = vmax.f32 %v787, %v788
    %v790 = vsel %vm691, %v683, -inf
    %v791 = vrot.slane %v790, 4
    %v792 = vmax.f32 %v790, %v791
    %v793 = vrot.slane %v792, 2
    %v794 = vmax.f32 %v792, %v793
    %v795 = vrot.slane %v794, 1
    %v796 = vmax.f32 %v794, %v795
    %v797 = vsel %vm691, %v688, -inf
    %v798 = vrot.slane %v797, 4
    %v799 = vmax.f32 %v797, %v798
    %v800 = vrot.slane %v799, 2
    %v801 = vmax.f32 %v799, %v800
    %v802 = vrot.slane %v801, 1
    %v803 = vmax.f32 %v801, %v802
    %v804 = vsub.f32 %v613, %v698
    %v805 = vsub.f32 %v618, %v705
    %v806 = vsub.f32 %v623, %v712
    %v807 = vsub.f32 %v628, %v719
    %v808 = vsub.f32 %v633, %v726
    %v809 = vsub.f32 %v638, %v733
    %v810 = vsub.f32 %v643, %v740
    %v811 = vsub.f32 %v648, %v747
    %v812 = vsub.f32 %v653, %v754
    %v813 = vsub.f32 %v658, %v761
    %v814 = vsub.f32 %v663, %v768
    %v815 = vsub.f32 %v668, %v775
    %v816 = vsub.f32 %v673, %v782
    %v817 = vsub.f32 %v678, %v789
    %v818 = vsub.f32 %v683, %v796
    %v819 = vsub.f32 %v688, %v803
    %v820 = vmul.f32 %v804, 1.442695
    %v821 = vpow.pop %v820
    %v822 = vmul.f32 %v805, 1.442695
    %v823 = vpow.pop %v822
    %v824 = vmul.f32 %v806, 1.442695
    %v825 = vpow.pop %v824
    %v826 = vmul.f32 %v807, 1.442695
    %v827 = vpow.pop %v826
    %v828 = vmul.f32 %v808, 1.442695
    %v829 = vpow.pop %v828
    %v830 = vmul.f32 %v809, 1.442695
    %v831 = vpow.pop %v830
    %v832 = vmul.f32 %v810, 1.442695
    %v833 = vpow.pop %v832
    %v834 = vmul.f32 %v811, 1.442695
    %v835 = vpow.pop %v834
    %v836 = vmul.f32 %v812, 1.442695
    %v837 = vpow.pop %v836
    %v838 = vmul.f32 %v813, 1.442695
    %v839 = vpow.pop %v838
    %v840 = vmul.f32 %v814, 1.442695
    %v841 = vpow.pop %v840
    %v842 = vmul.f32 %v815, 1.442695
    %v843 = vpow.pop %v842
    %v844 = vmul.f32 %v816, 1.442695
    %v845 = vpow.pop %v844
    %v846 = vmul.f32 %v817, 1.442695
    %v847 = vpow.pop %v846
    %v848 = vmul.f32 %v818, 1.442695
    %v849 = vpow.pop %v848
    %v850 = vmul.f32 %v819, 1.442695
    %v851 = vpow.pop %v850
    %v852 = vsel %vm691, %v821, 0.0
    %v853 = vrot.slane %v852, 4
    %v854 = vadd.f32 %v852, %v853
    %v855 = vrot.slane %v854, 2
    %v856 = vadd.f32 %v854, %v855
    %v857 = vrot.slane %v856, 1
    %v858 = vadd.f32 %v856, %v857
    %v859 = vsel %vm691, %v823, 0.0
    %v860 = vrot.slane %v859, 4
    %v861 = vadd.f32 %v859, %v860
    %v862 = vrot.slane %v861, 2
    %v863 = vadd.f32 %v861, %v862
    %v864 = vrot.slane %v863, 1
    %v865 = vadd.f32 %v863, %v864
    %v866 = vsel %vm691, %v825, 0.0
    %v867 = vrot.slane %v866, 4
    %v868 = vadd.f32 %v866, %v867
    %v869 = vrot.slane %v868, 2
    %v870 = vadd.f32 %v868, %v869
    %v871 = vrot.slane %v870, 1
    %v872 = vadd.f32 %v870, %v871
    %v873 = vsel %vm691, %v827, 0.0
    %v874 = vrot.slane %v873, 4
    %v875 = vadd.f32 %v873, %v874
    %v876 = vrot.slane %v875, 2
    %v877 = vadd.f32 %v875, %v876
    %v878 = vrot.slane %v877, 1
    %v879 = vadd.f32 %v877, %v878
    %v880 = vsel %vm691, %v829, 0.0
    %v881 = vrot.slane %v880, 4
    %v882 = vadd.f32 %v880, %v881
    %v883 = vrot.slane %v882, 2
    %v884 = vadd.f32 %v882, %v883
    %v885 = vrot.slane %v884, 1
    %v886 = vadd.f32 %v884, %v885
    %v887 = vsel %vm691, %v831, 0.0
    %v888 = vrot.slane %v887, 4
    %v889 = vadd.f32 %v887, %v888
    %v890 = vrot.slane %v889, 2
    %v891 = vadd.f32 %v889, %v890
    %v892 = vrot.slane %v891, 1
    %v893 = vadd.f32 %v891, %v892
    %v894 = vsel %vm691, %v833, 0.0
    %v895 = vrot.slane %v894, 4
    %v896 = vadd.f32 %v894, %v895
    %v897 = vrot.slane %v896, 2
    %v898 = vadd.f32 %v896, %v897
    %v899 = vrot.slane %v898, 1
    %v900 = vadd.f32 %v898, %v899
    %v901 = vsel %vm691, %v835, 0.0
    %v902 = vrot.slane %v901, 4
    %v903 = vadd.f32 %v901, %v902
    %v904 = vrot.slane %v903, 2
    %v905 = vadd.f32 %v903, %v904
    %v906 = vrot.slane %v905, 1
    %v907 = vadd.f32 %v905, %v906
    %v908 = vsel %vm691, %v837, 0.0
    %v909 = vrot.slane %v908, 4
    %v910 = vadd.f32 %v908, %v909
    %v911 = vrot.slane %v910, 2
    %v912 = vadd.f32 %v910, %v911
    %v913 = vrot.slane %v912, 1
    %v914 = vadd.f32 %v912, %v913
    %v915 = vsel %vm691, %v839, 0.0
    %v916 = vrot.slane %v915, 4
    %v917 = vadd.f32 %v915, %v916
    %v918 = vrot.slane %v917, 2
    %v919 = vadd.f32 %v917, %v918
    %v920 = vrot.slane %v919, 1
    %v921 = vadd.f32 %v919, %v920
    %v922 = vsel %vm691, %v841, 0.0
    %v923 = vrot.slane %v922, 4
    %v924 = vadd.f32 %v922, %v923
    %v925 = vrot.slane %v924, 2
    %v926 = vadd.f32 %v924, %v925
    %v927 = vrot.slane %v926, 1
    %v928 = vadd.f32 %v926, %v927
    %v929 = vsel %vm691, %v843, 0.0
    %v930 = vrot.slane %v929, 4
    %v931 = vadd.f32 %v929, %v930
    %v932 = vrot.slane %v931, 2
    %v933 = vadd.f32 %v931, %v932
    %v934 = vrot.slane %v933, 1
    %v935 = vadd.f32 %v933, %v934
    %v936 = vsel %vm691, %v845, 0.0
    %v937 = vrot.slane %v936, 4
    %v938 = vadd.f32 %v936, %v937
    %v939 = vrot.slane %v938, 2
    %v940 = vadd.f32 %v938, %v939
    %v941 = vrot.slane %v940, 1
    %v942 = vadd.f32 %v940, %v941
    %v943 = vsel %vm691, %v847, 0.0
    %v944 = vrot.slane %v943, 4
    %v945 = vadd.f32 %v943, %v944
    %v946 = vrot.slane %v945, 2
    %v947 = vadd.f32 %v945, %v946
    %v948 = vrot.slane %v947, 1
    %v949 = vadd.f32 %v947, %v948
    %v950 = vsel %vm691, %v849, 0.0
    %v951 = vrot.slane %v950, 4
    %v952 = vadd.f32 %v950, %v951
    %v953 = vrot.slane %v952, 2
    %v954 = vadd.f32 %v952, %v953
    %v955 = vrot.slane %v954, 1
    %v956 = vadd.f32 %v954, %v955
    %v957 = vsel %vm691, %v851, 0.0
    %v958 = vrot.slane %v957, 4
    %v959 = vadd.f32 %v957, %v958
    %v960 = vrot.slane %v959, 2
    %v961 = vadd.f32 %v959, %v960
    %v962 = vrot.slane %v961, 1
    %v963 = vadd.f32 %v961, %v962
    %v964 = vrcp.pop %v858
    %v965 = vrcp.pop %v865
    %v966 = vrcp.pop %v872
    %v967 = vrcp.pop %v879
    %v968 = vrcp.pop %v886
    %v969 = vrcp.pop %v893
    %v970 = vrcp.pop %v900
    %v971 = vrcp.pop %v907
    %v972 = vrcp.pop %v914
    %v973 = vrcp.pop %v921
    %v974 = vrcp.pop %v928
    %v975 = vrcp.pop %v935
    %v976 = vrcp.pop %v942
    %v977 = vrcp.pop %v949
    %v978 = vrcp.pop %v956
    %v979 = vrcp.pop %v963
    %v980 = vmul.f32 %v821, %v964
    %v981 = vmul.f32 %v823, %v965
    %v982 = vmul.f32 %v825, %v966
    %v983 = vmul.f32 %v827, %v967
    %v984 = vmul.f32 %v829, %v968
    %v985 = vmul.f32 %v831, %v969
    %v986 = vmul.f32 %v833, %v970
    %v987 = vmul.f32 %v835, %v971
    %v988 = vmul.f32 %v837, %v972
    %v989 = vmul.f32 %v839, %v973
    %v990 = vmul.f32 %v841, %v974
    %v991 = vmul.f32 %v843, %v975
    %v992 = vmul.f32 %v845, %v976
    %v993 = vmul.f32 %v847, %v977
    %v994 = vmul.f32 %v849, %v978
    %v995 = vmul.f32 %v851, %v979
    %v996 = vld [vmem:[%s5] sm:$0xff]
    %v998 = vsel %vm691, %v980, 0
    %v1001 = vsel %vm691, %v981, 0
    %v1004 = vsel %vm691, %v982, 0
    %v1007 = vsel %vm691, %v983, 0
    %v1010 = vsel %vm691, %v984, 0
    %v1013 = vsel %vm691, %v985, 0
    %v1016 = vsel %vm691, %v986, 0
    %v1019 = vsel %vm691, %v987, 0
    %v1022 = vsel %vm691, %v988, 0
    %v1025 = vsel %vm691, %v989, 0
    %v1028 = vsel %vm691, %v990, 0
    %v1031 = vsel %vm691, %v991, 0
    %v1034 = vsel %vm691, %v992, 0
    %v1037 = vsel %vm691, %v993, 0
    %v1040 = vsel %vm691, %v994, 0
    %v1043 = vsel %vm691, %v995, 0
    %1045 = vmatprep.subr.mxu0 0.0
    %1046 = vmatpush1.msra.mxu0 0.0
    %1047 = vmatprep.subr.mxu0 0.0
    %1048 = vmatpush1.msra.mxu0 0.0
    %1049 = vmatprep.subr.mxu0 0.0
    %1050 = vmatpush1.msra.mxu0 0.0
    %1051 = vmatprep.subr.mxu0 0.0
    %1052 = vmatpush1.msra.mxu0 0.0
    %1053 = vmatprep.subr.mxu0 0.0
    %1054 = vmatpush1.msra.mxu0 0.0
    %1055 = vmatprep.subr.mxu0 0.0
    %1056 = vmatpush1.msra.mxu0 0.0
    %1057 = vmatprep.subr.mxu0 0.0
    %1058 = vmatpush1.msra.mxu0 0.0
    %1059 = vmatprep.subr.mxu0 0.0
    %1060 = vmatpush1.msra.mxu0 0.0
    %1061 = vmatprep.subr.mxu0 0.0
    %1062 = vmatpush1.msra.mxu0 0.0
    %1063 = vmatprep.subr.mxu0 0.0
    %1064 = vmatpush1.msra.mxu0 0.0
    %1065 = vmatprep.subr.mxu0 0.0
    %1066 = vmatpush1.msra.mxu0 0.0
    %1067 = vmatprep.subr.mxu0 0.0
    %1068 = vmatpush1.msra.mxu0 0.0
    %1069 = vmatprep.subr.mxu0 0.0
    %1070 = vmatpush1.msra.mxu0 0.0
    %1071 = vmatprep.subr.mxu0 0.0
    %1072 = vmatpush1.msra.mxu0 0.0
    %1073 = vmatprep.subr.mxu0 0.0
    %1074 = vmatpush1.msra.mxu0 0.0
    %1075 = vmatprep.subr.mxu0 0.0
    %1076 = vmatpush1.msra.mxu0 %v996
    %1077 = vmatprep.subr.mxu0 0.0
    %1078 = vmatpush2.msra.mxu0 0.0
    %1079 = vmatprep.subr.mxu0 0.0
    %1080 = vmatpush2.msra.mxu0 0.0
    %1081 = vmatprep.subr.mxu0 0.0
    %1082 = vmatpush2.msra.mxu0 0.0
    %1083 = vmatprep.subr.mxu0 0.0
    %1084 = vmatpush2.msra.mxu0 0.0
    %1085 = vmatprep.subr.mxu0 0.0
    %1086 = vmatpush2.msra.mxu0 0.0
    %1087 = vmatprep.subr.mxu0 0.0
    %1088 = vmatpush2.msra.mxu0 0.0
    %1089 = vmatprep.subr.mxu0 0.0
    %1090 = vmatpush2.msra.mxu0 0.0
    %1091 = vmatprep.subr.mxu0 0.0
    %1092 = vmatpush2.msra.mxu0 0.0
    %1093 = vmatprep.subr.mxu0 0.0
    %1094 = vmatpush2.msra.mxu0 0.0
    %1095 = vmatprep.subr.mxu0 0.0
    %1096 = vmatpush2.msra.mxu0 0.0
    %1097 = vmatprep.subr.mxu0 0.0
    %1098 = vmatpush2.msra.mxu0 0.0
    %1099 = vmatprep.subr.mxu0 0.0
    %1100 = vmatpush2.msra.mxu0 0.0
    %1101 = vmatprep.subr.mxu0 0.0
    %1102 = vmatpush2.msra.mxu0 0.0
    %1103 = vmatprep.subr.mxu0 0.0
    %1104 = vmatpush2.msra.mxu0 0.0
    %1105 = vmatprep.subr.mxu0 0.0
    %1106 = vmatpush2.msra.mxu0 0.0
    %1107 = vmatprep.subr.mxu0 0.0
    %1108 = vmatpush2.msra.mxu0 0.0
    %1109 = vmatprep.mubr.f32.mxu0 0.0
    %1110 = vmatmul.mubr.f32.gmra.mxu0 %v998
    %v1111 = vpop.f32.mrf.mxu0
    %v1112 = vadd.f32 0.0, %v1111
    %v1113 = vpop.f32.mrf.mxu0
    %1114 = vmatprep.mubr.f32.mxu0 0.0
    %1115 = vmatmul.mubr.f32.gmra.mxu0 %v1001
    %v1116 = vpop.f32.mrf.mxu0
    %v1117 = vadd.f32 0.0, %v1116
    %v1118 = vpop.f32.mrf.mxu0
    %1119 = vmatprep.mubr.f32.mxu0 0.0
    %1120 = vmatmul.mubr.f32.gmra.mxu0 %v1004
    %v1121 = vpop.f32.mrf.mxu0
    %v1122 = vadd.f32 0.0, %v1121
    %v1123 = vpop.f32.mrf.mxu0
    %1124 = vmatprep.mubr.f32.mxu0 0.0
    %1125 = vmatmul.mubr.f32.gmra.mxu0 %v1007
    %v1126 = vpop.f32.mrf.mxu0
    %v1127 = vadd.f32 0.0, %v1126
    %v1128 = vpop.f32.mrf.mxu0
    %1129 = vmatprep.mubr.f32.mxu0 0.0
    %1130 = vmatmul.mubr.f32.gmra.mxu0 %v1010
    %v1131 = vpop.f32.mrf.mxu0
    %v1132 = vadd.f32 0.0, %v1131
    %v1133 = vpop.f32.mrf.mxu0
    %1134 = vmatprep.mubr.f32.mxu0 0.0
    %1135 = vmatmul.mubr.f32.gmra.mxu0 %v1013
    %v1136 = vpop.f32.mrf.mxu0
    %v1137 = vadd.f32 0.0, %v1136
    %v1138 = vpop.f32.mrf.mxu0
    %1139 = vmatprep.mubr.f32.mxu0 0.0
    %1140 = vmatmul.mubr.f32.gmra.mxu0 %v1016
    %v1141 = vpop.f32.mrf.mxu0
    %v1142 = vadd.f32 0.0, %v1141
    %v1143 = vpop.f32.mrf.mxu0
    %1144 = vmatprep.mubr.f32.mxu0 0.0
    %1145 = vmatmul.mubr.f32.gmra.mxu0 %v1019
    %v1146 = vpop.f32.mrf.mxu0
    %v1147 = vadd.f32 0.0, %v1146
    %v1148 = vpop.f32.mrf.mxu0
    %1149 = vmatprep.mubr.f32.mxu0 0.0
    %1150 = vmatmul.mubr.f32.gmra.mxu0 %v1022
    %v1151 = vpop.f32.mrf.mxu0
    %v1152 = vadd.f32 0.0, %v1151
    %v1153 = vpop.f32.mrf.mxu0
    %1154 = vmatprep.mubr.f32.mxu0 0.0
    %1155 = vmatmul.mubr.f32.gmra.mxu0 %v1025
    %v1156 = vpop.f32.mrf.mxu0
    %v1157 = vadd.f32 0.0, %v1156
    %v1158 = vpop.f32.mrf.mxu0
    %1159 = vmatprep.mubr.f32.mxu0 0.0
    %1160 = vmatmul.mubr.f32.gmra.mxu0 %v1028
    %v1161 = vpop.f32.mrf.mxu0
    %v1162 = vadd.f32 0.0, %v1161
    %v1163 = vpop.f32.mrf.mxu0
    %1164 = vmatprep.mubr.f32.mxu0 0.0
    %1165 = vmatmul.mubr.f32.gmra.mxu0 %v1031
    %v1166 = vpop.f32.mrf.mxu0
    %v1167 = vadd.f32 0.0, %v1166
    %v1168 = vpop.f32.mrf.mxu0
    %1169 = vmatprep.mubr.f32.mxu0 0.0
    %1170 = vmatmul.mubr.f32.gmra.mxu0 %v1034
    %v1171 = vpop.f32.mrf.mxu0
    %v1172 = vadd.f32 0.0, %v1171
    %v1173 = vpop.f32.mrf.mxu0
    %1174 = vmatprep.mubr.f32.mxu0 0.0
    %1175 = vmatmul.mubr.f32.gmra.mxu0 %v1037
    %v1176 = vpop.f32.mrf.mxu0
    %v1177 = vadd.f32 0.0, %v1176
    %v1178 = vpop.f32.mrf.mxu0
    %1179 = vmatprep.mubr.f32.mxu0 0.0
    %1180 = vmatmul.mubr.f32.gmra.mxu0 %v1040
    %v1181 = vpop.f32.mrf.mxu0
    %v1182 = vadd.f32 0.0, %v1181
    %v1183 = vpop.f32.mrf.mxu0
    %1184 = vmatprep.mubr.f32.mxu0 0.0
    %1185 = vmatmul.mubr.f32.gmra.mxu0 %v1043
    %v1186 = vpop.f32.mrf.mxu0
    %v1187 = vadd.f32 0.0, %v1186
    %v1188 = vpop.f32.mrf.mxu0
    %1189 = vdwg.mxu0
    %v1190 = vmul.f32 %v1112, %v328
    %v1191 = vmul.f32 %v1117, %v328
    %v1192 = vmul.f32 %v1122, %v328
    %v1193 = vmul.f32 %v1127, %v328
    %v1194 = vmul.f32 %v1132, %v328
    %v1195 = vmul.f32 %v1137, %v328
    %v1196 = vmul.f32 %v1142, %v328
    %v1197 = vmul.f32 %v1147, %v328
    %v1198 = vmul.f32 %v1152, %v331
    %v1199 = vmul.f32 %v1157, %v331
    %v1200 = vmul.f32 %v1162, %v331
    %v1201 = vmul.f32 %v1167, %v331
    %v1202 = vmul.f32 %v1172, %v331
    %v1203 = vmul.f32 %v1177, %v331
    %v1204 = vmul.f32 %v1182, %v331
    %v1205 = vmul.f32 %v1187, %v331
    %v1206 = vrot.slane %v1190, 4
    %v1207 = vadd.f32 %v1190, %v1206
    %v1208 = vrot.slane %v1207, 2
    %v1209 = vadd.f32 %v1207, %v1208
    %v1210 = vrot.slane %v1209, 1
    %v1211 = vadd.f32 %v1209, %v1210
    %v1212 = vrot.slane %v1191, 4
    %v1213 = vadd.f32 %v1191, %v1212
    %v1214 = vrot.slane %v1213, 2
    %v1215 = vadd.f32 %v1213, %v1214
    %v1216 = vrot.slane %v1215, 1
    %v1217 = vadd.f32 %v1215, %v1216
    %v1218 = vrot.slane %v1192, 4
    %v1219 = vadd.f32 %v1192, %v1218
    %v1220 = vrot.slane %v1219, 2
    %v1221 = vadd.f32 %v1219, %v1220
    %v1222 = vrot.slane %v1221, 1
    %v1223 = vadd.f32 %v1221, %v1222
    %v1224 = vrot.slane %v1193, 4
    %v1225 = vadd.f32 %v1193, %v1224
    %v1226 = vrot.slane %v1225, 2
    %v1227 = vadd.f32 %v1225, %v1226
    %v1228 = vrot.slane %v1227, 1
    %v1229 = vadd.f32 %v1227, %v1228
    %v1230 = vrot.slane %v1194, 4
    %v1231 = vadd.f32 %v1194, %v1230
    %v1232 = vrot.slane %v1231, 2
    %v1233 = vadd.f32 %v1231, %v1232
    %v1234 = vrot.slane %v1233, 1
    %v1235 = vadd.f32 %v1233, %v1234
    %v1236 = vrot.slane %v1195, 4
    %v1237 = vadd.f32 %v1195, %v1236
    %v1238 = vrot.slane %v1237, 2
    %v1239 = vadd.f32 %v1237, %v1238
    %v1240 = vrot.slane %v1239, 1
    %v1241 = vadd.f32 %v1239, %v1240
    %v1242 = vrot.slane %v1196, 4
    %v1243 = vadd.f32 %v1196, %v1242
    %v1244 = vrot.slane %v1243, 2
    %v1245 = vadd.f32 %v1243, %v1244
    %v1246 = vrot.slane %v1245, 1
    %v1247 = vadd.f32 %v1245, %v1246
    %v1248 = vrot.slane %v1197, 4
    %v1249 = vadd.f32 %v1197, %v1248
    %v1250 = vrot.slane %v1249, 2
    %v1251 = vadd.f32 %v1249, %v1250
    %v1252 = vrot.slane %v1251, 1
    %v1253 = vadd.f32 %v1251, %v1252
    %v1254 = vrot.slane %v1198, 4
    %v1255 = vadd.f32 %v1198, %v1254
    %v1256 = vrot.slane %v1255, 2
    %v1257 = vadd.f32 %v1255, %v1256
    %v1258 = vrot.slane %v1257, 1
    %v1259 = vadd.f32 %v1257, %v1258
    %v1260 = vrot.slane %v1199, 4
    %v1261 = vadd.f32 %v1199, %v1260
    %v1262 = vrot.slane %v1261, 2
    %v1263 = vadd.f32 %v1261, %v1262
    %v1264 = vrot.slane %v1263, 1
    %v1265 = vadd.f32 %v1263, %v1264
    %v1266 = vrot.slane %v1200, 4
    %v1267 = vadd.f32 %v1200, %v1266
    %v1268 = vrot.slane %v1267, 2
    %v1269 = vadd.f32 %v1267, %v1268
    %v1270 = vrot.slane %v1269, 1
    %v1271 = vadd.f32 %v1269, %v1270
    %v1272 = vrot.slane %v1201, 4
    %v1273 = vadd.f32 %v1201, %v1272
    %v1274 = vrot.slane %v1273, 2
    %v1275 = vadd.f32 %v1273, %v1274
    %v1276 = vrot.slane %v1275, 1
    %v1277 = vadd.f32 %v1275, %v1276
    %v1278 = vrot.slane %v1202, 4
    %v1279 = vadd.f32 %v1202, %v1278
    %v1280 = vrot.slane %v1279, 2
    %v1281 = vadd.f32 %v1279, %v1280
    %v1282 = vrot.slane %v1281, 1
    %v1283 = vadd.f32 %v1281, %v1282
    %v1284 = vrot.slane %v1203, 4
    %v1285 = vadd.f32 %v1203, %v1284
    %v1286 = vrot.slane %v1285, 2
    %v1287 = vadd.f32 %v1285, %v1286
    %v1288 = vrot.slane %v1287, 1
    %v1289 = vadd.f32 %v1287, %v1288
    %v1290 = vrot.slane %v1204, 4
    %v1291 = vadd.f32 %v1204, %v1290
    %v1292 = vrot.slane %v1291, 2
    %v1293 = vadd.f32 %v1291, %v1292
    %v1294 = vrot.slane %v1293, 1
    %v1295 = vadd.f32 %v1293, %v1294
    %v1296 = vrot.slane %v1205, 4
    %v1297 = vadd.f32 %v1205, %v1296
    %v1298 = vrot.slane %v1297, 2
    %v1299 = vadd.f32 %v1297, %v1298
    %v1300 = vrot.slane %v1299, 1
    %v1301 = vadd.f32 %v1299, %v1300
    %v1302 = vld [vmem:[%s6] sm:$0xff]
    %v1303 = vpack.c.bf16 %v1211, %v1211
    %v1304 = vpack.c.bf16 %v1217, %v1217
    %v1305 = vpack.c.bf16 %v1223, %v1223
    %v1306 = vpack.c.bf16 %v1229, %v1229
    %v1307 = vpack.c.bf16 %v1235, %v1235
    %v1308 = vpack.c.bf16 %v1241, %v1241
    %v1309 = vpack.c.bf16 %v1247, %v1247
    %v1310 = vpack.c.bf16 %v1253, %v1253
    %v1311 = vpack.c.bf16 %v1259, %v1259
    %v1312 = vpack.c.bf16 %v1265, %v1265
    %v1313 = vpack.c.bf16 %v1271, %v1271
    %v1314 = vpack.c.bf16 %v1277, %v1277
    %v1315 = vpack.c.bf16 %v1283, %v1283
    %v1316 = vpack.c.bf16 %v1289, %v1289
    %v1317 = vpack.c.bf16 %v1295, %v1295
    %v1318 = vpack.c.bf16 %v1301, %v1301
    %v1319 = vld [vmem:[%s3] sm:$0xf]
    %v1320 = vld [vmem:[%s3 + $0x4] sm:$0xf]
    %v1321 = vld [vmem:[%s3 + $0x8] sm:$0xf]
    %v1322 = vld [vmem:[%s3 + $0xc] sm:$0xf]
    %v1323 = vld [vmem:[%s3 + $0x10] sm:$0xf]
    %v1324 = vld [vmem:[%s3 + $0x14] sm:$0xf]
    %v1325 = vld [vmem:[%s3 + $0x18] sm:$0xf]
    %v1326 = vld [vmem:[%s3 + $0x1c] sm:$0xf]
    %v1327 = vld [vmem:[%s3 + $0x20] sm:$0xf]
    %v1328 = vld [vmem:[%s3 + $0x24] sm:$0xf]
    %v1329 = vld [vmem:[%s3 + $0x28] sm:$0xf]
    %v1330 = vld [vmem:[%s3 + $0x2c] sm:$0xf]
    %v1331 = vld [vmem:[%s3 + $0x30] sm:$0xf]
    %v1332 = vld [vmem:[%s3 + $0x34] sm:$0xf]
    %v1333 = vld [vmem:[%s3 + $0x38] sm:$0xf]
    %v1334 = vld [vmem:[%s3 + $0x3c] sm:$0xf]
    %v1335 = vlaneseq
    %v1336 = vshrl.u32 %v1335, 7
    %v1337 = vsub.s32 0, %v1336
    %v1338 = vrot.slane %v1302, %v1337
    %v1355 = vunpack.c.l.b16 %v1303
    %v1356 = vunpack.c.l.b16 %v1304
    %v1357 = vunpack.c.l.b16 %v1305
    %v1358 = vunpack.c.l.b16 %v1306
    %v1359 = vunpack.c.l.b16 %v1307
    %v1360 = vunpack.c.l.b16 %v1308
    %v1361 = vunpack.c.l.b16 %v1309
    %v1362 = vunpack.c.l.b16 %v1310
    %v1363 = vunpack.c.l.b16 %v1311
    %v1364 = vunpack.c.l.b16 %v1312
    %v1365 = vunpack.c.l.b16 %v1313
    %v1366 = vunpack.c.l.b16 %v1314
    %v1367 = vunpack.c.l.b16 %v1315
    %v1368 = vunpack.c.l.b16 %v1316
    %v1369 = vunpack.c.l.b16 %v1317
    %v1370 = vunpack.c.l.b16 %v1318
    %vm1371 = vcmask 1041409
    %v1372 = vsel %vm1371, %v1356, %v1355
    %vm1373 = vcmask 1042434
    %v1374 = vsel %vm1373, %v1357, %v1372
    %vm1375 = vcmask 1043459
    %v1376 = vsel %vm1375, %v1358, %v1374
    %vm1377 = vcmask 1044484
    %v1378 = vsel %vm1377, %v1359, %v1376
    %vm1379 = vcmask 1045509
    %v1380 = vsel %vm1379, %v1360, %v1378
    %vm1381 = vcmask 1046534
    %v1382 = vsel %vm1381, %v1361, %v1380
    %vm1383 = vcmask 1047559
    %v1384 = vsel %vm1383, %v1362, %v1382
    %v1385 = vsel %vm1371, %v1364, %v1363
    %v1386 = vsel %vm1373, %v1365, %v1385
    %v1387 = vsel %vm1375, %v1366, %v1386
    %v1388 = vsel %vm1377, %v1367, %v1387
    %v1389 = vsel %vm1379, %v1368, %v1388
    %v1390 = vsel %vm1381, %v1369, %v1389
    %v1391 = vsel %vm1383, %v1370, %v1390
    %v1392 = vpack.c.b16 %v1391, %v1384
    %v1410 = vunpack.c.l.b16 %v1319
    %v1411 = vunpack.c.l.b16 %v1320
    %v1412 = vunpack.c.l.b16 %v1321
    %v1413 = vunpack.c.l.b16 %v1322
    %v1414 = vunpack.c.l.b16 %v1323
    %v1415 = vunpack.c.l.b16 %v1324
    %v1416 = vunpack.c.l.b16 %v1325
    %v1417 = vunpack.c.l.b16 %v1326
    %v1418 = vunpack.c.l.b16 %v1327
    %v1419 = vunpack.c.l.b16 %v1328
    %v1420 = vunpack.c.l.b16 %v1329
    %v1421 = vunpack.c.l.b16 %v1330
    %v1422 = vunpack.c.l.b16 %v1331
    %v1423 = vunpack.c.l.b16 %v1332
    %v1424 = vunpack.c.l.b16 %v1333
    %v1425 = vunpack.c.l.b16 %v1334
    %v1426 = vpack.c.b16 %v1411, %v1410
    %v1427 = vpack.c.b16 %v1413, %v1412
    %v1428 = vpack.c.b16 %v1415, %v1414
    %v1429 = vpack.c.b16 %v1417, %v1416
    %v1430 = vpack.c.b16 %v1419, %v1418
    %v1431 = vpack.c.b16 %v1421, %v1420
    %v1432 = vpack.c.b16 %v1423, %v1422
    %v1433 = vpack.c.b16 %v1425, %v1424
    %1442 = vmatprep.subr.bf16.mxu0 0
    %1443 = vmatpush1.bf16.msra.mxu0 %v1433
    %1444 = vmatprep.subr.bf16.mxu0 0
    %1445 = vmatpush1.bf16.msra.mxu0 %v1432
    %1446 = vmatprep.subr.bf16.mxu0 0
    %1447 = vmatpush1.bf16.msra.mxu0 %v1431
    %1448 = vmatprep.subr.bf16.mxu0 0
    %1449 = vmatpush1.bf16.msra.mxu0 %v1430
    %1450 = vmatprep.subr.bf16.mxu0 0
    %1451 = vmatpush1.bf16.msra.mxu0 %v1429
    %1452 = vmatprep.subr.bf16.mxu0 0
    %1453 = vmatpush1.bf16.msra.mxu0 %v1428
    %1454 = vmatprep.subr.bf16.mxu0 0
    %1455 = vmatpush1.bf16.msra.mxu0 %v1427
    %1456 = vmatprep.subr.bf16.mxu0 0
    %1457 = vmatpush1.bf16.msra.mxu0 %v1426
    %1458 = vmatprep.subr.bf16.mxu0 0
    %1459 = vmatpush2.bf16.msra.mxu0 0
    %1460 = vmatprep.subr.bf16.mxu0 0
    %1461 = vmatpush2.bf16.msra.mxu0 0
    %1462 = vmatprep.subr.bf16.mxu0 0
    %1463 = vmatpush2.bf16.msra.mxu0 0
    %1464 = vmatprep.subr.bf16.mxu0 0
    %1465 = vmatpush2.bf16.msra.mxu0 0
    %1466 = vmatprep.subr.bf16.mxu0 0
    %1467 = vmatpush2.bf16.msra.mxu0 0
    %1468 = vmatprep.subr.bf16.mxu0 0
    %1469 = vmatpush2.bf16.msra.mxu0 0
    %1470 = vmatprep.subr.bf16.mxu0 0
    %1471 = vmatpush2.bf16.msra.mxu0 0
    %1472 = vmatprep.subr.bf16.mxu0 0
    %1473 = vmatpush2.bf16.msra.mxu0 0
    %1474 = vmatprep.mubr.bf16.mxu0 0
    %1475 = vmatmul.mubr.bf16.gmra.mxu0 %v1392
    %v1476 = vpop.f32.mrf.mxu0
    %v1477 = vadd.f32 %v1338, %v1476
    %v1478 = vpop.f32.mrf.mxu0
    %v1479 = vpop.f32.mrf.mxu0
    %v1480 = vadd.f32 %v1338, %v1479
    %v1481 = vpop.f32.mrf.mxu0
    %1482 = vdwg.mxu0
    %v1483 = vadd.f32 %v1477, %v70
    %v1484 = vadd.f32 %v1480, %v71
    %v1485 = vadd.f32 %v1483, %v1484
    %v1486 = vrot.slane %v1485, 4
    %v1487 = vadd.f32 %v1485, %v1486
    %v1488 = vrot.slane %v1487, 2
    %v1489 = vadd.f32 %v1487, %v1488
    %v1490 = vrot.slane %v1489, 1
    %v1491 = vadd.f32 %v1489, %v1490
    %v1492 = vrcp.pop 16.0
    %v1493 = vmul.f32 %v1491, %v1492
    %v1494 = vsub.f32 %v1483, %v1493
    %v1495 = vsub.f32 %v1484, %v1493
    %v1496 = vmul.f32 %v1494, %v1494
    %v1497 = vmul.f32 %v1495, %v1495
    %v1498 = vadd.f32 %v1496, %v1497
    %v1499 = vrot.slane %v1498, 4
    %v1500 = vadd.f32 %v1498, %v1499
    %v1501 = vrot.slane %v1500, 2
    %v1502 = vadd.f32 %v1500, %v1501
    %v1503 = vrot.slane %v1502, 1
    %v1504 = vadd.f32 %v1502, %v1503
    %v1505 = vmul.f32 %v1504, %v1492
    %v1506 = vadd.f32 %v1505, 1e-05
    %v1507 = vrsqrt.pop %v1506
    %v1508 = vmul.f32 %v1494, %v1507
    %v1509 = vmul.f32 %v1495, %v1507
    %v1510 = vlaneseq
    %v1511 = vshrl.u32 %v1510, 7
    %v1512 = vsub.s32 2, %v1511
    %v1513 = vrot.slane %v1302, %v1512
    %v1514 = vmul.f32 %v1508, %v1513
    %v1515 = vmul.f32 %v1509, %v1513
    %v1516 = vlaneseq
    %v1517 = vshrl.u32 %v1516, 7
    %v1518 = vsub.s32 3, %v1517
    %v1519 = vrot.slane %v1302, %v1518
    %v1520 = vadd.f32 %v1514, %v1519
    %v1521 = vadd.f32 %v1515, %v1519
    %s1522 = smul.u32 4, 16
    %s1523 = smul.u32 %s1522, 4
    %s1524 = sshll.u32 %s1523, 4
    %1525 = dma.done [#allocation4], %s1524
    %v1526 = vpack.c.bf16 %v1521, %v1520
    %v1527 = vld [vmem:[#allocation2] sm:$0xff]
    %v1528 = vld [vmem:[#allocation2 + $0x8] sm:$0xff]
    %v1529 = vld [vmem:[#allocation2 + $0x10] sm:$0xff]
    %v1530 = vld [vmem:[#allocation2 + $0x18] sm:$0xff]
    %v1531 = vld [vmem:[#allocation2 + $0x20] sm:$0xff]
    %v1532 = vld [vmem:[#allocation2 + $0x28] sm:$0xff]
    %v1533 = vld [vmem:[#allocation2 + $0x30] sm:$0xff]
    %v1534 = vld [vmem:[#allocation2 + $0x38] sm:$0xff]
    %v1535 = vld [vmem:[#allocation2 + $0x40] sm:$0xff]
    %v1536 = vld [vmem:[#allocation2 + $0x48] sm:$0xff]
    %v1537 = vld [vmem:[#allocation2 + $0x50] sm:$0xff]
    %v1538 = vld [vmem:[#allocation2 + $0x58] sm:$0xff]
    %v1539 = vld [vmem:[#allocation2 + $0x60] sm:$0xff]
    %v1540 = vld [vmem:[#allocation2 + $0x68] sm:$0xff]
    %v1541 = vld [vmem:[#allocation2 + $0x70] sm:$0xff]
    %v1542 = vld [vmem:[#allocation2 + $0x78] sm:$0xff]
    %v1543 = vld [vmem:[#allocation2 + $0x80] sm:$0xff]
    %v1544 = vld [vmem:[#allocation2 + $0x88] sm:$0xff]
    %v1545 = vld [vmem:[#allocation2 + $0x90] sm:$0xff]
    %v1546 = vld [vmem:[#allocation2 + $0x98] sm:$0xff]
    %v1547 = vld [vmem:[#allocation2 + $0xa0] sm:$0xff]
    %v1548 = vld [vmem:[#allocation2 + $0xa8] sm:$0xff]
    %v1549 = vld [vmem:[#allocation2 + $0xb0] sm:$0xff]
    %v1550 = vld [vmem:[#allocation2 + $0xb8] sm:$0xff]
    %v1551 = vld [vmem:[#allocation2 + $0xc0] sm:$0xff]
    %v1552 = vld [vmem:[#allocation2 + $0xc8] sm:$0xff]
    %v1553 = vld [vmem:[#allocation2 + $0xd0] sm:$0xff]
    %v1554 = vld [vmem:[#allocation2 + $0xd8] sm:$0xff]
    %v1555 = vld [vmem:[#allocation2 + $0xe0] sm:$0xff]
    %v1556 = vld [vmem:[#allocation2 + $0xe8] sm:$0xff]
    %v1557 = vld [vmem:[#allocation2 + $0xf0] sm:$0xff]
    %v1558 = vld [vmem:[#allocation2 + $0xf8] sm:$0xff]
    %v1559 = vld [vmem:[%s7] sm:$0xf]
    %v1561 = vlaneseq
    %v1562 = vshrl.u32 %v1561, 7
    %v1563 = vsub.s32 0, %v1562
    %v1564 = vrot.slane %v1559, %v1563
    %v1565 = vlaneseq
    %v1566 = vshrl.u32 %v1565, 7
    %v1567 = vsub.s32 1, %v1566
    %v1568 = vrot.slane %v1559, %v1567
    %v1569 = vlaneseq
    %v1570 = vshrl.u32 %v1569, 7
    %v1571 = vsub.s32 2, %v1570
    %v1572 = vrot.slane %v1559, %v1571
    %v1573 = vlaneseq
    %v1574 = vshrl.u32 %v1573, 7
    %v1575 = vsub.s32 3, %v1574
    %v1576 = vrot.slane %v1559, %v1575
    %v1613 = vunpack.c.l.b16 %v1527
    %v1614 = vunpack.c.h.b16 %v1527
    %v1615 = vunpack.c.l.b16 %v1528
    %v1616 = vunpack.c.h.b16 %v1528
    %v1617 = vunpack.c.l.b16 %v1529
    %v1618 = vunpack.c.h.b16 %v1529
    %v1619 = vunpack.c.l.b16 %v1530
    %v1620 = vunpack.c.h.b16 %v1530
    %v1621 = vunpack.c.l.b16 %v1531
    %v1622 = vunpack.c.h.b16 %v1531
    %v1623 = vunpack.c.l.b16 %v1532
    %v1624 = vunpack.c.h.b16 %v1532
    %v1625 = vunpack.c.l.b16 %v1533
    %v1626 = vunpack.c.h.b16 %v1533
    %v1627 = vunpack.c.l.b16 %v1534
    %v1628 = vunpack.c.h.b16 %v1534
    %v1629 = vunpack.c.l.b16 %v1535
    %v1630 = vunpack.c.h.b16 %v1535
    %v1631 = vunpack.c.l.b16 %v1536
    %v1632 = vunpack.c.h.b16 %v1536
    %v1633 = vunpack.c.l.b16 %v1537
    %v1634 = vunpack.c.h.b16 %v1537
    %v1635 = vunpack.c.l.b16 %v1538
    %v1636 = vunpack.c.h.b16 %v1538
    %v1637 = vunpack.c.l.b16 %v1539
    %v1638 = vunpack.c.h.b16 %v1539
    %v1639 = vunpack.c.l.b16 %v1540
    %v1640 = vunpack.c.h.b16 %v1540
    %v1641 = vunpack.c.l.b16 %v1541
    %v1642 = vunpack.c.h.b16 %v1541
    %v1643 = vunpack.c.l.b16 %v1542
    %v1644 = vunpack.c.h.b16 %v1542
    %v1645 = vunpack.c.l.b16 %v1543
    %v1646 = vunpack.c.h.b16 %v1543
    %v1647 = vunpack.c.l.b16 %v1544
    %v1648 = vunpack.c.h.b16 %v1544
    %v1649 = vunpack.c.l.b16 %v1545
    %v1650 = vunpack.c.h.b16 %v1545
    %v1651 = vunpack.c.l.b16 %v1546
    %v1652 = vunpack.c.h.b16 %v1546
    %v1653 = vunpack.c.l.b16 %v1547
    %v1654 = vunpack.c.h.b16 %v1547
    %v1655 = vunpack.c.l.b16 %v1548
    %v1656 = vunpack.c.h.b16 %v1548
    %v1657 = vunpack.c.l.b16 %v1549
    %v1658 = vunpack.c.h.b16 %v1549
    %v1659 = vunpack.c.l.b16 %v1550
    %v1660 = vunpack.c.h.b16 %v1550
    %v1661 = vunpack.c.l.b16 %v1551
    %v1662 = vunpack.c.h.b16 %v1551
    %v1663 = vunpack.c.l.b16 %v1552
    %v1664 = vunpack.c.h.b16 %v1552
    %v1665 = vunpack.c.l.b16 %v1553
    %v1666 = vunpack.c.h.b16 %v1553
    %v1667 = vunpack.c.l.b16 %v1554
    %v1668 = vunpack.c.h.b16 %v1554
    %v1669 = vunpack.c.l.b16 %v1555
    %v1670 = vunpack.c.h.b16 %v1555
    %v1671 = vunpack.c.l.b16 %v1556
    %v1672 = vunpack.c.h.b16 %v1556
    %v1673 = vunpack.c.l.b16 %v1557
    %v1674 = vunpack.c.h.b16 %v1557
    %v1675 = vunpack.c.l.b16 %v1558
    %v1676 = vunpack.c.h.b16 %v1558
    %v1677 = vpack.c.b16 %v1617, %v1613
    %v1678 = vpack.c.b16 %v1618, %v1614
    %v1679 = vpack.c.b16 %v1619, %v1615
    %v1680 = vpack.c.b16 %v1620, %v1616
    %v1681 = vpack.c.b16 %v1625, %v1621
    %v1682 = vpack.c.b16 %v1626, %v1622
    %v1683 = vpack.c.b16 %v1627, %v1623
    %v1684 = vpack.c.b16 %v1628, %v1624
    %v1685 = vpack.c.b16 %v1633, %v1629
    %v1686 = vpack.c.b16 %v1634, %v1630
    %v1687 = vpack.c.b16 %v1635, %v1631
    %v1688 = vpack.c.b16 %v1636, %v1632
    %v1689 = vpack.c.b16 %v1641, %v1637
    %v1690 = vpack.c.b16 %v1642, %v1638
    %v1691 = vpack.c.b16 %v1643, %v1639
    %v1692 = vpack.c.b16 %v1644, %v1640
    %v1693 = vpack.c.b16 %v1649, %v1645
    %v1694 = vpack.c.b16 %v1650, %v1646
    %v1695 = vpack.c.b16 %v1651, %v1647
    %v1696 = vpack.c.b16 %v1652, %v1648
    %v1697 = vpack.c.b16 %v1657, %v1653
    %v1698 = vpack.c.b16 %v1658, %v1654
    %v1699 = vpack.c.b16 %v1659, %v1655
    %v1700 = vpack.c.b16 %v1660, %v1656
    %v1701 = vpack.c.b16 %v1665, %v1661
    %v1702 = vpack.c.b16 %v1666, %v1662
    %v1703 = vpack.c.b16 %v1667, %v1663
    %v1704 = vpack.c.b16 %v1668, %v1664
    %v1705 = vpack.c.b16 %v1673, %v1669
    %v1706 = vpack.c.b16 %v1674, %v1670
    %v1707 = vpack.c.b16 %v1675, %v1671
    %v1708 = vpack.c.b16 %v1676, %v1672
    %1741 = vmatprep.subr.bf16.mxu0 %v1706
    %1742 = vmatpush1.bf16.msra.mxu0 %v1705
    %1743 = vmatprep.subr.bf16.mxu0 %v1702
    %1744 = vmatpush1.bf16.msra.mxu0 %v1701
    %1745 = vmatprep.subr.bf16.mxu0 %v1698
    %1746 = vmatpush1.bf16.msra.mxu0 %v1697
    %1747 = vmatprep.subr.bf16.mxu0 %v1694
    %1748 = vmatpush1.bf16.msra.mxu0 %v1693
    %1749 = vmatprep.subr.bf16.mxu0 %v1690
    %1750 = vmatpush1.bf16.msra.mxu0 %v1689
    %1751 = vmatprep.subr.bf16.mxu0 %v1686
    %1752 = vmatpush1.bf16.msra.mxu0 %v1685
    %1753 = vmatprep.subr.bf16.mxu0 %v1682
    %1754 = vmatpush1.bf16.msra.mxu0 %v1681
    %1755 = vmatprep.subr.bf16.mxu0 %v1678
    %1756 = vmatpush1.bf16.msra.mxu0 %v1677
    %1757 = vmatprep.subr.bf16.mxu0 0
    %1758 = vmatpush2.bf16.msra.mxu0 0
    %1759 = vmatprep.subr.bf16.mxu0 0
    %1760 = vmatpush2.bf16.msra.mxu0 0
    %1761 = vmatprep.subr.bf16.mxu0 0
    %1762 = vmatpush2.bf16.msra.mxu0 0
    %1763 = vmatprep.subr.bf16.mxu0 0
    %1764 = vmatpush2.bf16.msra.mxu0 0
    %1765 = vmatprep.subr.bf16.mxu0 0
    %1766 = vmatpush2.bf16.msra.mxu0 0
    %1767 = vmatprep.subr.bf16.mxu0 0
    %1768 = vmatpush2.bf16.msra.mxu0 0
    %1769 = vmatprep.subr.bf16.mxu0 0
    %1770 = vmatpush2.bf16.msra.mxu0 0
    %1771 = vmatprep.subr.bf16.mxu0 0
    %1772 = vmatpush2.bf16.msra.mxu0 0
    %1773 = vmatprep.mubr.bf16.mxu0 0
    %1774 = vmatmul.mubr.bf16.gmra.mxu0 %v1526
    %v1775 = vpop.f32.mrf.mxu0
    %v1776 = vadd.f32 %v1564, %v1775
    %v1777 = vpop.f32.mrf.mxu0
    %v1778 = vadd.f32 %v1568, %v1777
    %v1779 = vpop.f32.mrf.mxu0
    %v1780 = vadd.f32 %v1564, %v1779
    %v1781 = vpop.f32.mrf.mxu0
    %v1782 = vadd.f32 %v1568, %v1781
    %1783 = vdwg.mxu0
    %1784 = vmatprep.subr.bf16.mxu0 %v1708
    %1785 = vmatpush1.bf16.msra.mxu0 %v1707
    %1786 = vmatprep.subr.bf16.mxu0 %v1704
    %1787 = vmatpush1.bf16.msra.mxu0 %v1703
    %1788 = vmatprep.subr.bf16.mxu0 %v1700
    %1789 = vmatpush1.bf16.msra.mxu0 %v1699
    %1790 = vmatprep.subr.bf16.mxu0 %v1696
    %1791 = vmatpush1.bf16.msra.mxu0 %v1695
    %1792 = vmatprep.subr.bf16.mxu0 %v1692
    %1793 = vmatpush1.bf16.msra.mxu0 %v1691
    %1794 = vmatprep.subr.bf16.mxu0 %v1688
    %1795 = vmatpush1.bf16.msra.mxu0 %v1687
    %1796 = vmatprep.subr.bf16.mxu0 %v1684
    %1797 = vmatpush1.bf16.msra.mxu0 %v1683
    %1798 = vmatprep.subr.bf16.mxu0 %v1680
    %1799 = vmatpush1.bf16.msra.mxu0 %v1679
    %1800 = vmatprep.subr.bf16.mxu0 0
    %1801 = vmatpush2.bf16.msra.mxu0 0
    %1802 = vmatprep.subr.bf16.mxu0 0
    %1803 = vmatpush2.bf16.msra.mxu0 0
    %1804 = vmatprep.subr.bf16.mxu0 0
    %1805 = vmatpush2.bf16.msra.mxu0 0
    %1806 = vmatprep.subr.bf16.mxu0 0
    %1807 = vmatpush2.bf16.msra.mxu0 0
    %1808 = vmatprep.subr.bf16.mxu0 0
    %1809 = vmatpush2.bf16.msra.mxu0 0
    %1810 = vmatprep.subr.bf16.mxu0 0
    %1811 = vmatpush2.bf16.msra.mxu0 0
    %1812 = vmatprep.subr.bf16.mxu0 0
    %1813 = vmatpush2.bf16.msra.mxu0 0
    %1814 = vmatprep.subr.bf16.mxu0 0
    %1815 = vmatpush2.bf16.msra.mxu0 0
    %1816 = vmatprep.mubr.bf16.mxu0 0
    %1817 = vmatmul.mubr.bf16.gmra.mxu0 %v1526
    %v1818 = vpop.f32.mrf.mxu0
    %v1819 = vadd.f32 %v1572, %v1818
    %v1820 = vpop.f32.mrf.mxu0
    %v1821 = vadd.f32 %v1576, %v1820
    %v1822 = vpop.f32.mrf.mxu0
    %v1823 = vadd.f32 %v1572, %v1822
    %v1824 = vpop.f32.mrf.mxu0
    %v1825 = vadd.f32 %v1576, %v1824
    %1826 = vdwg.mxu0
    %v1827 = vmax.f32 %v1776, 0.0
    %v1828 = vmax.f32 %v1778, 0.0
    %v1829 = vmax.f32 %v1819, 0.0
    %v1830 = vmax.f32 %v1821, 0.0
    %v1831 = vmax.f32 %v1780, 0.0
    %v1832 = vmax.f32 %v1782, 0.0
    %v1833 = vmax.f32 %v1823, 0.0
    %v1834 = vmax.f32 %v1825, 0.0
    %s1835 = smul.u32 4, 64
    %s1836 = smul.u32 %s1835, 1
    %s1837 = sshll.u32 %s1836, 4
    %1838 = dma.done %s58, %s1837
    %v1839 = vpack.c.bf16 %v1831, %v1827
    %v1840 = vpack.c.bf16 %v1832, %v1828
    %v1841 = vpack.c.bf16 %v1833, %v1829
    %v1842 = vpack.c.bf16 %v1834, %v1830
    %v1843 = vld [vmem:[#allocation3] sm:$0xf]
    %v1844 = vld [vmem:[#allocation3 + $0x4] sm:$0xf]
    %v1845 = vld [vmem:[#allocation3 + $0x8] sm:$0xf]
    %v1846 = vld [vmem:[#allocation3 + $0xc] sm:$0xf]
    %v1847 = vld [vmem:[#allocation3 + $0x10] sm:$0xf]
    %v1848 = vld [vmem:[#allocation3 + $0x14] sm:$0xf]
    %v1849 = vld [vmem:[#allocation3 + $0x18] sm:$0xf]
    %v1850 = vld [vmem:[#allocation3 + $0x1c] sm:$0xf]
    %v1851 = vld [vmem:[#allocation3 + $0x20] sm:$0xf]
    %v1852 = vld [vmem:[#allocation3 + $0x24] sm:$0xf]
    %v1853 = vld [vmem:[#allocation3 + $0x28] sm:$0xf]
    %v1854 = vld [vmem:[#allocation3 + $0x2c] sm:$0xf]
    %v1855 = vld [vmem:[#allocation3 + $0x30] sm:$0xf]
    %v1856 = vld [vmem:[#allocation3 + $0x34] sm:$0xf]
    %v1857 = vld [vmem:[#allocation3 + $0x38] sm:$0xf]
    %v1858 = vld [vmem:[#allocation3 + $0x3c] sm:$0xf]
    %v1859 = vld [vmem:[#allocation3 + $0x40] sm:$0xf]
    %v1860 = vld [vmem:[#allocation3 + $0x44] sm:$0xf]
    %v1861 = vld [vmem:[#allocation3 + $0x48] sm:$0xf]
    %v1862 = vld [vmem:[#allocation3 + $0x4c] sm:$0xf]
    %v1863 = vld [vmem:[#allocation3 + $0x50] sm:$0xf]
    %v1864 = vld [vmem:[#allocation3 + $0x54] sm:$0xf]
    %v1865 = vld [vmem:[#allocation3 + $0x58] sm:$0xf]
    %v1866 = vld [vmem:[#allocation3 + $0x5c] sm:$0xf]
    %v1867 = vld [vmem:[#allocation3 + $0x60] sm:$0xf]
    %v1868 = vld [vmem:[#allocation3 + $0x64] sm:$0xf]
    %v1869 = vld [vmem:[#allocation3 + $0x68] sm:$0xf]
    %v1870 = vld [vmem:[#allocation3 + $0x6c] sm:$0xf]
    %v1871 = vld [vmem:[#allocation3 + $0x70] sm:$0xf]
    %v1872 = vld [vmem:[#allocation3 + $0x74] sm:$0xf]
    %v1873 = vld [vmem:[#allocation3 + $0x78] sm:$0xf]
    %v1874 = vld [vmem:[#allocation3 + $0x7c] sm:$0xf]
    %v1875 = vld [vmem:[#allocation3 + $0x80] sm:$0xf]
    %v1876 = vld [vmem:[#allocation3 + $0x84] sm:$0xf]
    %v1877 = vld [vmem:[#allocation3 + $0x88] sm:$0xf]
    %v1878 = vld [vmem:[#allocation3 + $0x8c] sm:$0xf]
    %v1879 = vld [vmem:[#allocation3 + $0x90] sm:$0xf]
    %v1880 = vld [vmem:[#allocation3 + $0x94] sm:$0xf]
    %v1881 = vld [vmem:[#allocation3 + $0x98] sm:$0xf]
    %v1882 = vld [vmem:[#allocation3 + $0x9c] sm:$0xf]
    %v1883 = vld [vmem:[#allocation3 + $0xa0] sm:$0xf]
    %v1884 = vld [vmem:[#allocation3 + $0xa4] sm:$0xf]
    %v1885 = vld [vmem:[#allocation3 + $0xa8] sm:$0xf]
    %v1886 = vld [vmem:[#allocation3 + $0xac] sm:$0xf]
    %v1887 = vld [vmem:[#allocation3 + $0xb0] sm:$0xf]
    %v1888 = vld [vmem:[#allocation3 + $0xb4] sm:$0xf]
    %v1889 = vld [vmem:[#allocation3 + $0xb8] sm:$0xf]
    %v1890 = vld [vmem:[#allocation3 + $0xbc] sm:$0xf]
    %v1891 = vld [vmem:[#allocation3 + $0xc0] sm:$0xf]
    %v1892 = vld [vmem:[#allocation3 + $0xc4] sm:$0xf]
    %v1893 = vld [vmem:[#allocation3 + $0xc8] sm:$0xf]
    %v1894 = vld [vmem:[#allocation3 + $0xcc] sm:$0xf]
    %v1895 = vld [vmem:[#allocation3 + $0xd0] sm:$0xf]
    %v1896 = vld [vmem:[#allocation3 + $0xd4] sm:$0xf]
    %v1897 = vld [vmem:[#allocation3 + $0xd8] sm:$0xf]
    %v1898 = vld [vmem:[#allocation3 + $0xdc] sm:$0xf]
    %v1899 = vld [vmem:[#allocation3 + $0xe0] sm:$0xf]
    %v1900 = vld [vmem:[#allocation3 + $0xe4] sm:$0xf]
    %v1901 = vld [vmem:[#allocation3 + $0xe8] sm:$0xf]
    %v1902 = vld [vmem:[#allocation3 + $0xec] sm:$0xf]
    %v1903 = vld [vmem:[#allocation3 + $0xf0] sm:$0xf]
    %v1904 = vld [vmem:[#allocation3 + $0xf4] sm:$0xf]
    %v1905 = vld [vmem:[#allocation3 + $0xf8] sm:$0xf]
    %v1906 = vld [vmem:[#allocation3 + $0xfc] sm:$0xf]
    %v1971 = vunpack.c.l.b16 %v1843
    %v1972 = vunpack.c.l.b16 %v1844
    %v1973 = vunpack.c.l.b16 %v1845
    %v1974 = vunpack.c.l.b16 %v1846
    %v1975 = vunpack.c.l.b16 %v1847
    %v1976 = vunpack.c.l.b16 %v1848
    %v1977 = vunpack.c.l.b16 %v1849
    %v1978 = vunpack.c.l.b16 %v1850
    %v1979 = vunpack.c.l.b16 %v1851
    %v1980 = vunpack.c.l.b16 %v1852
    %v1981 = vunpack.c.l.b16 %v1853
    %v1982 = vunpack.c.l.b16 %v1854
    %v1983 = vunpack.c.l.b16 %v1855
    %v1984 = vunpack.c.l.b16 %v1856
    %v1985 = vunpack.c.l.b16 %v1857
    %v1986 = vunpack.c.l.b16 %v1858
    %v1987 = vunpack.c.l.b16 %v1859
    %v1988 = vunpack.c.l.b16 %v1860
    %v1989 = vunpack.c.l.b16 %v1861
    %v1990 = vunpack.c.l.b16 %v1862
    %v1991 = vunpack.c.l.b16 %v1863
    %v1992 = vunpack.c.l.b16 %v1864
    %v1993 = vunpack.c.l.b16 %v1865
    %v1994 = vunpack.c.l.b16 %v1866
    %v1995 = vunpack.c.l.b16 %v1867
    %v1996 = vunpack.c.l.b16 %v1868
    %v1997 = vunpack.c.l.b16 %v1869
    %v1998 = vunpack.c.l.b16 %v1870
    %v1999 = vunpack.c.l.b16 %v1871
    %v2000 = vunpack.c.l.b16 %v1872
    %v2001 = vunpack.c.l.b16 %v1873
    %v2002 = vunpack.c.l.b16 %v1874
    %v2003 = vunpack.c.l.b16 %v1875
    %v2004 = vunpack.c.l.b16 %v1876
    %v2005 = vunpack.c.l.b16 %v1877
    %v2006 = vunpack.c.l.b16 %v1878
    %v2007 = vunpack.c.l.b16 %v1879
    %v2008 = vunpack.c.l.b16 %v1880
    %v2009 = vunpack.c.l.b16 %v1881
    %v2010 = vunpack.c.l.b16 %v1882
    %v2011 = vunpack.c.l.b16 %v1883
    %v2012 = vunpack.c.l.b16 %v1884
    %v2013 = vunpack.c.l.b16 %v1885
    %v2014 = vunpack.c.l.b16 %v1886
    %v2015 = vunpack.c.l.b16 %v1887
    %v2016 = vunpack.c.l.b16 %v1888
    %v2017 = vunpack.c.l.b16 %v1889
    %v2018 = vunpack.c.l.b16 %v1890
    %v2019 = vunpack.c.l.b16 %v1891
    %v2020 = vunpack.c.l.b16 %v1892
    %v2021 = vunpack.c.l.b16 %v1893
    %v2022 = vunpack.c.l.b16 %v1894
    %v2023 = vunpack.c.l.b16 %v1895
    %v2024 = vunpack.c.l.b16 %v1896
    %v2025 = vunpack.c.l.b16 %v1897
    %v2026 = vunpack.c.l.b16 %v1898
    %v2027 = vunpack.c.l.b16 %v1899
    %v2028 = vunpack.c.l.b16 %v1900
    %v2029 = vunpack.c.l.b16 %v1901
    %v2030 = vunpack.c.l.b16 %v1902
    %v2031 = vunpack.c.l.b16 %v1903
    %v2032 = vunpack.c.l.b16 %v1904
    %v2033 = vunpack.c.l.b16 %v1905
    %v2034 = vunpack.c.l.b16 %v1906
    %v2035 = vpack.c.b16 %v1972, %v1971
    %v2036 = vpack.c.b16 %v1974, %v1973
    %v2037 = vpack.c.b16 %v1976, %v1975
    %v2038 = vpack.c.b16 %v1978, %v1977
    %v2039 = vpack.c.b16 %v1980, %v1979
    %v2040 = vpack.c.b16 %v1982, %v1981
    %v2041 = vpack.c.b16 %v1984, %v1983
    %v2042 = vpack.c.b16 %v1986, %v1985
    %v2043 = vpack.c.b16 %v1988, %v1987
    %v2044 = vpack.c.b16 %v1990, %v1989
    %v2045 = vpack.c.b16 %v1992, %v1991
    %v2046 = vpack.c.b16 %v1994, %v1993
    %v2047 = vpack.c.b16 %v1996, %v1995
    %v2048 = vpack.c.b16 %v1998, %v1997
    %v2049 = vpack.c.b16 %v2000, %v1999
    %v2050 = vpack.c.b16 %v2002, %v2001
    %v2051 = vpack.c.b16 %v2004, %v2003
    %v2052 = vpack.c.b16 %v2006, %v2005
    %v2053 = vpack.c.b16 %v2008, %v2007
    %v2054 = vpack.c.b16 %v2010, %v2009
    %v2055 = vpack.c.b16 %v2012, %v2011
    %v2056 = vpack.c.b16 %v2014, %v2013
    %v2057 = vpack.c.b16 %v2016, %v2015
    %v2058 = vpack.c.b16 %v2018, %v2017
    %v2059 = vpack.c.b16 %v2020, %v2019
    %v2060 = vpack.c.b16 %v2022, %v2021
    %v2061 = vpack.c.b16 %v2024, %v2023
    %v2062 = vpack.c.b16 %v2026, %v2025
    %v2063 = vpack.c.b16 %v2028, %v2027
    %v2064 = vpack.c.b16 %v2030, %v2029
    %v2065 = vpack.c.b16 %v2032, %v2031
    %v2066 = vpack.c.b16 %v2034, %v2033
    %2099 = vmatprep.subr.bf16.mxu0 0
    %2100 = vmatpush1.bf16.msra.mxu0 %v2042
    %2101 = vmatprep.subr.bf16.mxu0 0
    %2102 = vmatpush1.bf16.msra.mxu0 %v2041
    %2103 = vmatprep.subr.bf16.mxu0 0
    %2104 = vmatpush1.bf16.msra.mxu0 %v2040
    %2105 = vmatprep.subr.bf16.mxu0 0
    %2106 = vmatpush1.bf16.msra.mxu0 %v2039
    %2107 = vmatprep.subr.bf16.mxu0 0
    %2108 = vmatpush1.bf16.msra.mxu0 %v2038
    %2109 = vmatprep.subr.bf16.mxu0 0
    %2110 = vmatpush1.bf16.msra.mxu0 %v2037
    %2111 = vmatprep.subr.bf16.mxu0 0
    %2112 = vmatpush1.bf16.msra.mxu0 %v2036
    %2113 = vmatprep.subr.bf16.mxu0 0
    %2114 = vmatpush1.bf16.msra.mxu0 %v2035
    %2115 = vmatprep.subr.bf16.mxu0 0
    %2116 = vmatpush2.bf16.msra.mxu0 %v2050
    %2117 = vmatprep.subr.bf16.mxu0 0
    %2118 = vmatpush2.bf16.msra.mxu0 %v2049
    %2119 = vmatprep.subr.bf16.mxu0 0
    %2120 = vmatpush2.bf16.msra.mxu0 %v2048
    %2121 = vmatprep.subr.bf16.mxu0 0
    %2122 = vmatpush2.bf16.msra.mxu0 %v2047
    %2123 = vmatprep.subr.bf16.mxu0 0
    %2124 = vmatpush2.bf16.msra.mxu0 %v2046
    %2125 = vmatprep.subr.bf16.mxu0 0
    %2126 = vmatpush2.bf16.msra.mxu0 %v2045
    %2127 = vmatprep.subr.bf16.mxu0 0
    %2128 = vmatpush2.bf16.msra.mxu0 %v2044
    %2129 = vmatprep.subr.bf16.mxu0 0
    %2130 = vmatpush2.bf16.msra.mxu0 %v2043
    %2131 = vmatprep.mubr.bf16.mxu0 %v1840
    %2132 = vmatmul.mubr.bf16.gmra.mxu0 %v1839
    %v2133 = vpop.f32.mrf.mxu0
    %v2134 = vadd.f32 0.0, %v2133
    %v2135 = vpop.f32.mrf.mxu0
    %v2136 = vpop.f32.mrf.mxu0
    %v2137 = vadd.f32 0.0, %v2136
    %v2138 = vpop.f32.mrf.mxu0
    %2139 = vdwg.mxu0
    %2140 = vmatprep.subr.bf16.mxu0 0
    %2141 = vmatpush1.bf16.msra.mxu0 %v2058
    %2142 = vmatprep.subr.bf16.mxu0 0
    %2143 = vmatpush1.bf16.msra.mxu0 %v2057
    %2144 = vmatprep.subr.bf16.mxu0 0
    %2145 = vmatpush1.bf16.msra.mxu0 %v2056
    %2146 = vmatprep.subr.bf16.mxu0 0
    %2147 = vmatpush1.bf16.msra.mxu0 %v2055
    %2148 = vmatprep.subr.bf16.mxu0 0
    %2149 = vmatpush1.bf16.msra.mxu0 %v2054
    %2150 = vmatprep.subr.bf16.mxu0 0
    %2151 = vmatpush1.bf16.msra.mxu0 %v2053
    %2152 = vmatprep.subr.bf16.mxu0 0
    %2153 = vmatpush1.bf16.msra.mxu0 %v2052
    %2154 = vmatprep.subr.bf16.mxu0 0
    %2155 = vmatpush1.bf16.msra.mxu0 %v2051
    %2156 = vmatprep.subr.bf16.mxu0 0
    %2157 = vmatpush2.bf16.msra.mxu0 %v2066
    %2158 = vmatprep.subr.bf16.mxu0 0
    %2159 = vmatpush2.bf16.msra.mxu0 %v2065
    %2160 = vmatprep.subr.bf16.mxu0 0
    %2161 = vmatpush2.bf16.msra.mxu0 %v2064
    %2162 = vmatprep.subr.bf16.mxu0 0
    %2163 = vmatpush2.bf16.msra.mxu0 %v2063
    %2164 = vmatprep.subr.bf16.mxu0 0
    %2165 = vmatpush2.bf16.msra.mxu0 %v2062
    %2166 = vmatprep.subr.bf16.mxu0 0
    %2167 = vmatpush2.bf16.msra.mxu0 %v2061
    %2168 = vmatprep.subr.bf16.mxu0 0
    %2169 = vmatpush2.bf16.msra.mxu0 %v2060
    %2170 = vmatprep.subr.bf16.mxu0 0
    %2171 = vmatpush2.bf16.msra.mxu0 %v2059
    %2172 = vmatprep.mubr.bf16.mxu0 %v1842
    %2173 = vmatmul.mubr.bf16.gmra.mxu0 %v1841
    %v2174 = vpop.f32.mrf.mxu0
    %v2175 = vadd.f32 %v2134, %v2174
    %v2176 = vpop.f32.mrf.mxu0
    %v2177 = vpop.f32.mrf.mxu0
    %v2178 = vadd.f32 %v2137, %v2177
    %v2179 = vpop.f32.mrf.mxu0
    %2180 = vdwg.mxu0
    %v2181 = vadd.f32 %v1520, %v2175
    %v2182 = vadd.f32 %v1521, %v2178
    %v2183 = vlaneseq
    %v2184 = vshrl.u32 %v2183, 7
    %v2185 = vsub.s32 1, %v2184
    %v2186 = vrot.slane %v1302, %v2185
    %v2187 = vadd.f32 %v2181, %v2186
    %v2188 = vadd.f32 %v2182, %v2186
    %v2189 = vadd.f32 %v2187, %v2188
    %v2190 = vrot.slane %v2189, 4
    %v2191 = vadd.f32 %v2189, %v2190
    %v2192 = vrot.slane %v2191, 2
    %v2193 = vadd.f32 %v2191, %v2192
    %v2194 = vrot.slane %v2193, 1
    %v2195 = vadd.f32 %v2193, %v2194
    %v2196 = vmul.f32 %v2195, %v1492
    %v2197 = vsub.f32 %v2187, %v2196
    %v2198 = vsub.f32 %v2188, %v2196
    %v2199 = vmul.f32 %v2197, %v2197
    %v2200 = vmul.f32 %v2198, %v2198
    %v2201 = vadd.f32 %v2199, %v2200
    %v2202 = vrot.slane %v2201, 4
    %v2203 = vadd.f32 %v2201, %v2202
    %v2204 = vrot.slane %v2203, 2
    %v2205 = vadd.f32 %v2203, %v2204
    %v2206 = vrot.slane %v2205, 1
    %v2207 = vadd.f32 %v2205, %v2206
    %v2208 = vmul.f32 %v2207, %v1492
    %v2209 = vadd.f32 %v2208, 1e-05
    %v2210 = vrsqrt.pop %v2209
    %v2211 = vmul.f32 %v2197, %v2210
    %v2212 = vmul.f32 %v2198, %v2210
    %v2213 = vlaneseq
    %v2214 = vshrl.u32 %v2213, 7
    %v2215 = vsub.s32 4, %v2214
    %v2216 = vrot.slane %v1302, %v2215
    %v2217 = vmul.f32 %v2211, %v2216
    %v2218 = vmul.f32 %v2212, %v2216
    %v2219 = vlaneseq
    %v2220 = vshrl.u32 %v2219, 7
    %v2221 = vsub.s32 5, %v2220
    %v2222 = vrot.slane %v1302, %v2221
    %v2223 = vadd.f32 %v2217, %v2222
    %v2224 = vadd.f32 %v2218, %v2222
    %2225 = vst [vmem:[#allocation8] sm:$0xff] %v2223
    %2226 = vst [vmem:[#allocation8 + $0x8] sm:$0xff] %v2224
    // Predicated region
    $region46: #{tpu_custom_call.1} parent=1 // pred_check
      _
    $region47: #{tpu_custom_call.1} parent=1 // pred_check_branch
      %2228 = sbr.rel (0) target = $region49
    $region48: #{tpu_custom_call.1} parent=1 // pred_region
      %s2230 = ssub.s32 256, 256
      %2231 = vsyncadd [#allocation7], %s2230
      %s2232 = sshll.u32 [#allocation8], 4
      %s2233 = int_to_ptr.vmem [resolvable:$true] %s2232
      %2238 = dma.vmem_to_hbm [thread:$0]  %s2233, 256, %s10, [#allocation7], 128, 128, 8
    $region49: #{tpu_custom_call.1} parent=1 // pred_fallthru
      _
    // Predicated region
    $region50: #{tpu_custom_call.1} parent=1 // pred_check
      _
    $region51: #{tpu_custom_call.1} parent=1 // pred_check_branch
      %2240 = sbr.rel (0) target = $region53
    $region52: #{tpu_custom_call.1} parent=1 // pred_region
      %2241 = dma.done [#allocation7], 256
    $region53: #{tpu_custom_call.1} parent=1 // pred_fallthru
      _
    %2242 = vsyncpa [#allocation6], 1
    %2243 = vsyncpa [#allocation7], 1
  %2244 = vsyncmov [#allocation4]
  %s2245 = vpop.sfrf %2244
  %p2246 = scmp.eq.s32.totalorder %s2245, 0
  %p2247 = pneg %p2246
  %2249 = shalt.err (%p2247)
  %s2250 = scalar_lea.sflag [#allocation4], 1
  %2251 = vsyncmov %s2250
  %s2252 = vpop.sfrf %2251
  %p2253 = scmp.eq.s32.totalorder %s2252, 0
  %p2254 = pneg %p2253
  %2256 = shalt.err (%p2254)

</llo_original>
